<compile_context>
chip_gen: v5e
topology: v5e:2x2
jax: 0.10.0
libtpu: 0.0.40
codegen_flags: <defaults>
</compile_context>

<pallas_src>
import math
from collections import OrderedDict

import numpy as np
import jax
import jax.numpy as jnp
from jax.experimental import pallas as pl
from jax.experimental.pallas import tpu as pltpu

HUGE_NUMBER = 1e10
TINY_NUMBER = 1e-6


# ----------------------------------------------------------------------------
# Pallas kernels (2-D tiles only: rows = rays of one sample slice, lanes = feat)
# ----------------------------------------------------------------------------
def _lin(h, w_ref, b_ref):
    # bf16 MXU operands, f32 accumulation, f32 bias add.
    return jnp.dot(h.astype(jnp.bfloat16), w_ref[...],
                   preferred_element_type=jnp.float32) + b_ref[...]


def _lin2(h1, w1_ref, h2, w2_ref, b_ref):
    return (jnp.dot(h1.astype(jnp.bfloat16), w1_ref[...],
                    preferred_element_type=jnp.float32)
            + jnp.dot(h2.astype(jnp.bfloat16), w2_ref[...],
                      preferred_element_type=jnp.float32)
            + b_ref[...])


def _relu(t):
    return jnp.maximum(t, 0.0)


def _fg_mlp_kernel(x_ref, v_ref,
                   w00, b00, w01, b01, w02, b02, w03, b03,
                   w10a, w10b, b10, w11, b11, w12, b12, w13, b13,
                   w_head, b_head, wr1a, wr1b, br1, wfr, bfr,
                   out_ref):
    x = x_ref[...]          # (tr, Din)   f32
    v = v_ref[...]          # (tr, Dvd)   f32, one row per ray (no duplication)

    # density_net0 : 4 x (Linear + ReLU)
    h = _relu(_lin(x, w00, b00))
    h = _relu(_lin(h, w01, b01))
    h = _relu(_lin(h, w02, b02))
    h = _relu(_lin(h, w03, b03))
    # density_net1 : first layer consumes cat(h, x); then 3 x (Linear + ReLU)
    h = _relu(_lin2(h, w10a, x, w10b, b10))
    h = _relu(_lin(h, w11, b11))
    h = _relu(_lin(h, w12, b12))
    h = _relu(_lin(h, w13, b13))
    # fused head: columns [0:hidden] = rgb_net0 output, column [hidden] = density
    head = _lin(h, w_head, b_head)                        # (tr, hidden + 1)
    hidden = wr1a.shape[0]
    r = head[:, :hidden]
    dens = head[:, hidden:hidden + 1]
    # rgb_net1 consumes cat(r, viewdirs), final_rgb
    r = _relu(_lin2(r, wr1a, v, wr1b, br1))
    rgb = _lin(r, wfr, bfr)
    # single lane-denser output: [density | rgb]
    out_ref[...] = jnp.concatenate([dens, rgb], axis=-1)   # (tr, 4)


def _bg_mlp_kernel(p_ref, v_ref,
                   wb0, bb0, wb1, bb1, wb2, bb2, wb3, bb3, wb4, bb4,
                   wb5a, wb5b, bb5, wb6, bb6, wb7, bb7,
                   w_head, b_head, wr0a, wr0b, br0, wr1, br1,
                   out_ref):
    p = p_ref[...]          # (tr, Dpos)
    v = v_ref[...]          # (tr, Dvd) per-ray

    base = _relu(_lin(p, wb0, bb0))
    base = _relu(_lin(base, wb1, bb1))
    base = _relu(_lin(base, wb2, bb2))
    base = _relu(_lin(base, wb3, bb3))
    base = _relu(_lin(base, wb4, bb4))
    # skip connection: cat(input_pts, base) into layer 5
    base = _relu(_lin2(p, wb5a, base, wb5b, bb5))
    base = _relu(_lin(base, wb6, bb6))
    base = _relu(_lin(base, wb7, bb7))
    # fused head: columns [0:256] = base_remap, column [256] = sigma (pre-abs)
    head = _lin(base, w_head, b_head)                     # (tr, 257)
    nrm = wr0a.shape[0]
    remap = head[:, :nrm]
    sigma = jnp.abs(head[:, nrm:nrm + 1])
    h = _relu(_lin2(remap, wr0a, v, wr0b, br0))
    rgb = jax.nn.sigmoid(_lin(h, wr1, br1))
    out_ref[...] = jnp.concatenate([sigma, rgb], axis=-1)  # (tr, 4)


# ----------------------------------------------------------------------------
# Kernel wrappers
# ----------------------------------------------------------------------------
def _round_up(x, m):
    return ((x + m - 1) // m) * m


def _run_mlp(kernel, x3, v2, weights, tr):
    """x3: (S, R, Dx) sample-major per-sample features (f32).
       v2: (R, Dv)   per-ray features (f32).
       returns (S, R, 4) f32."""
    S, R, Dx = x3.shape
    Dv = v2.shape[1]

    # Row tile: multiple of 8, clamped to the (padded) ray count. Sweep 128/256/512.
    tr = max(8, _round_up(min(int(tr), R), 8))
    Rp = _round_up(R, tr)
    if Rp != R:
        x3 = jnp.pad(x3, ((0, 0), (0, Rp - R), (0, 0)))
        v2 = jnp.pad(v2, ((0, Rp - R), (0, 0)))

    grid = (Rp // tr, S)

    x_spec = pl.BlockSpec((None, tr, Dx), lambda j, s: (s, j, 0))
    v_spec = pl.BlockSpec((tr, Dv), lambda j, s: (j, 0))        # re-used across samples
    w_specs = [pl.BlockSpec(w.shape, lambda j, s: (0, 0)) for w in weights]
    out_spec = pl.BlockSpec((None, tr, 4), lambda j, s: (s, j, 0))

    out = pl.pallas_call(
        kernel,
        grid=grid,
        in_specs=[x_spec, v_spec] + w_specs,
        out_specs=out_spec,
        out_shape=jax.ShapeDtypeStruct((S, Rp, 4), jnp.float32),
        compiler_params=pltpu.CompilerParams(
            dimension_semantics=("parallel", "parallel")),
    )(x3, v2, *weights)
    return out[:, :R, :]


def _bf16(a):
    return a.astype(jnp.bfloat16)


def _prep_fg_weights(p):
    # fuse rgb_net0 and final_density heads: h @ [wr0 | wfd]
    w_head = jnp.concatenate([p['wr0'], p['wfd']], axis=1)
    b_head = jnp.concatenate([p['br0'], p['bfd']], axis=1)
    return [
        _bf16(p['w00']), p['b00'], _bf16(p['w01']), p['b01'],
        _bf16(p['w02']), p['b02'], _bf16(p['w03']), p['b03'],
        _bf16(p['w10a']), _bf16(p['w10b']), p['b10'],
        _bf16(p['w11']), p['b11'], _bf16(p['w12']), p['b12'],
        _bf16(p['w13']), p['b13'],
        _bf16(w_head), b_head,
        _bf16(p['wr1a']), _bf16(p['wr1b']), p['br1'],
        _bf16(p['wfr']), p['bfr'],
    ]


def _prep_bg_weights(p):
    # fuse base_remap and sigma heads: base @ [wrm | ws]
    w_head = jnp.concatenate([p['wrm'], p['ws']], axis=1)
    b_head = jnp.concatenate([p['brm'], p['bs']], axis=1)
    return [
        _bf16(p['wb0']), p['bb0'], _bf16(p['wb1']), p['bb1'],
        _bf16(p['wb2']), p['bb2'], _bf16(p['wb3']), p['bb3'],
        _bf16(p['wb4']), p['bb4'],
        _bf16(p['wb5a']), _bf16(p['wb5b']), p['bb5'],
        _bf16(p['wb6']), p['bb6'], _bf16(p['wb7']), p['bb7'],
        _bf16(w_head), b_head,
        _bf16(p['wr0a']), _bf16(p['wr0b']), p['br0'],
        _bf16(p['wr1']), p['br1'],
    ]


def fg_mlp_pallas(x_sample_major, viewdir_feat, params, tr=256):
    """x_sample_major: (N, R, Din), viewdir_feat: (R, Dvd).
       returns raw_density (R, N, 1), raw_rgb (R, N, 3)."""
    out = _run_mlp(_fg_mlp_kernel, x_sample_major, viewdir_feat,
                   _prep_fg_weights(params), tr)
    out = jnp.swapaxes(out, 0, 1)                 # (R, N, 4)
    return out[..., 0:1], out[..., 1:4]


def bg_mlp_pallas(p_sample_major, viewdir_feat, params, tr=128):
    """p_sample_major: (K, R, Dpos), viewdir_feat: (R, Dvd).
       returns sigma (R, K), rgb (R, K, 3)."""
    out = _run_mlp(_bg_mlp_kernel, p_sample_major, viewdir_feat,
                   _prep_bg_weights(params), tr)
    out = jnp.swapaxes(out, 0, 1)                 # (R, K, 4)
    return out[..., 0], out[..., 1:4]


# ----------------------------------------------------------------------------
# Plain-JAX glue (encodings, geometry, rendering)
# ----------------------------------------------------------------------------
def positional_encoding(x, scales, y=None):
    # matches the PyTorch PositionalEncoding.forward exactly
    shape = x.shape[:-1] + (-1,)
    x_enc = (x[..., None, :] * scales[:, None]).reshape(shape)
    x_enc = jnp.concatenate([x_enc, x_enc + 0.5 * jnp.pi], axis=-1)
    if y is None:
        return jnp.sin(x_enc)
    y_enc = (y[..., None, :] * (scales[:, None] ** 2)).reshape(shape)
    y_enc = jnp.concatenate([y_enc, y_enc], axis=-1)
    x_ret = jnp.exp(-0.5 * y_enc) * jnp.sin(x_enc)
    y_ret = jnp.maximum(jnp.zeros_like(y_enc),
                        0.5 * (1 - jnp.exp(-2 * y_enc) * jnp.cos(2 * x_enc)) - x_ret ** 2)
    return x_ret, y_ret


def embedder(x, n_freqs, max_freq_log2):
    # NeRF++-style embedder: [x, sin(f*x), cos(f*x), ...]
    freq_bands = 2.0 ** np.linspace(0.0, max_freq_log2, n_freqs)
    out = [x]
    for f in freq_bands:
        out.append(jnp.sin(x * float(f)))
        out.append(jnp.cos(x * float(f)))
    return jnp.concatenate(out, axis=-1)


def depth2pts_outside(ray_o, ray_d, depth):
    d1 = -jnp.sum(ray_d * ray_o, axis=-1) / jnp.sum(ray_d * ray_d, axis=-1)
    p_mid = ray_o + d1[..., None] * ray_d
    # clamp so ray origins on/outside the unit sphere cannot produce NaNs
    p_mid_norm = jnp.clip(jnp.linalg.norm(p_mid, axis=-1), 0.0, 1.0)
    ray_d_cos = 1.0 / jnp.linalg.norm(ray_d, axis=-1)
    d2 = jnp.sqrt(jnp.clip(1.0 - p_mid_norm * p_mid_norm, 0.0)) * ray_d_cos
    p_sphere = ray_o + (d1 + d2)[..., None] * ray_d
    rot_axis = jnp.cross(ray_o, p_sphere)
    rot_axis = rot_axis / jnp.linalg.norm(rot_axis, axis=-1, keepdims=True)
    phi = jnp.arcsin(p_mid_norm)
    theta = jnp.arcsin(p_mid_norm * depth)
    rot_angle = (phi - theta)[..., None]
    p_sphere_new = (p_sphere * jnp.cos(rot_angle)
                    + jnp.cross(rot_axis, p_sphere) * jnp.sin(rot_angle)
                    + rot_axis * jnp.sum(rot_axis * p_sphere, axis=-1, keepdims=True)
                    * (1.0 - jnp.cos(rot_angle)))
    p_sphere_new = p_sphere_new / jnp.linalg.norm(p_sphere_new, axis=-1, keepdims=True)
    pts = jnp.concatenate([p_sphere_new, depth[..., None]], axis=-1)
    depth_real = 1.0 / (depth + TINY_NUMBER) * jnp.cos(theta) * ray_d_cos + d1
    return pts, depth_real


def volumetric_rendering(rgb, density, t_vals, dirs, white_bkgd):
    # standard mip-NeRF rendering, extended with the NeRF++ bg_lambda
    t_mids = 0.5 * (t_vals[..., :-1] + t_vals[..., 1:])
    t_dists = t_vals[..., 1:] - t_vals[..., :-1]
    delta = t_dists * jnp.linalg.norm(dirs[..., None, :], axis=-1)
    density_delta = density[..., 0] * delta
    alpha = 1.0 - jnp.exp(-density_delta)
    trans = jnp.exp(-jnp.concatenate(
        [jnp.zeros_like(density_delta[..., :1]),
         jnp.cumsum(density_delta[..., :-1], axis=-1)], axis=-1))
    weights = alpha * trans
    comp_rgb = jnp.sum(weights[..., None] * rgb, axis=-2)
    acc = jnp.sum(weights, axis=-1)
    distance = jnp.sum(weights * t_mids, axis=-1) / jnp.maximum(acc, 1e-10)
    distance = jnp.clip(distance, t_vals[..., 0], t_vals[..., -1])
    bg_lambda = jnp.exp(-jnp.sum(density_delta, axis=-1))  # transmittance behind fg
    if white_bkgd:
        comp_rgb = comp_rgb + (1.0 - acc[..., None])
    return comp_rgb, distance, acc, weights, alpha, bg_lambda


# ----------------------------------------------------------------------------
# Parameter init (deterministic, Xavier-uniform weights like _xavier_init)
# ----------------------------------------------------------------------------
def _xavier_linear(key, fan_in, fan_out):
    kw, kb = jax.random.split(key)
    limit = math.sqrt(6.0 / (fan_in + fan_out))
    w = jax.random.uniform(kw, (fan_in, fan_out), jnp.float32, -limit, limit)
    bound = 1.0 / math.sqrt(fan_in)
    b = jax.random.uniform(kb, (1, fan_out), jnp.float32, -bound, bound)
    return w, b


def init_fg_params(key, din, hidden, dvd, nsamp):
    ks = jax.random.split(key, 12)
    p = {}
    p['w00'], p['b00'] = _xavier_linear(ks[0], din, hidden)
    p['w01'], p['b01'] = _xavier_linear(ks[1], hidden, hidden)
    p['w02'], p['b02'] = _xavier_linear(ks[2], hidden, hidden)
    p['w03'], p['b03'] = _xavier_linear(ks[3], hidden, hidden)
    w, b = _xavier_linear(ks[4], hidden + din, hidden)
    p['w10a'], p['w10b'], p['b10'] = w[:hidden], w[hidden:], b
    p['w11'], p['b11'] = _xavier_linear(ks[5], hidden, hidden)
    p['w12'], p['b12'] = _xavier_linear(ks[6], hidden, hidden)
    p['w13'], p['b13'] = _xavier_linear(ks[7], hidden, hidden)
    p['wfd'], p['bfd'] = _xavier_linear(ks[8], hidden, 1)
    p['wr0'], p['br0'] = _xavier_linear(ks[9], hidden, hidden)
    w, b = _xavier_linear(ks[10], hidden + dvd, nsamp)
    p['wr1a'], p['wr1b'], p['br1'] = w[:hidden], w[hidden:], b
    p['wfr'], p['bfr'] = _xavier_linear(ks[11], nsamp, 3)
    return p


def init_bg_params(key, pos_dim, vd_dim, W):
    ks = jax.random.split(key, 13)
    p = {}
    p['wb0'], p['bb0'] = _xavier_linear(ks[0], pos_dim, W)
    p['wb1'], p['bb1'] = _xavier_linear(ks[1], W, W)
    p['wb2'], p['bb2'] = _xavier_linear(ks[2], W, W)
    p['wb3'], p['bb3'] = _xavier_linear(ks[3], W, W)
    p['wb4'], p['bb4'] = _xavier_linear(ks[4], W, W)
    w, b = _xavier_linear(ks[5], pos_dim + W, W)     # skip: cat(pts, base)
    p['wb5a'], p['wb5b'], p['bb5'] = w[:pos_dim], w[pos_dim:], b
    p['wb6'], p['bb6'] = _xavier_linear(ks[6], W, W)
    p['wb7'], p['bb7'] = _xavier_linear(ks[7], W, W)
    p['ws'], p['bs'] = _xavier_linear(ks[8], W, 1)
    p['wrm'], p['brm'] = _xavier_linear(ks[9], W, 256)
    w, b = _xavier_linear(ks[10], 256 + vd_dim, W // 2)
    p['wr0a'], p['wr0b'], p['br0'] = w[:256], w[256:], b
    p['wr1'], p['br1'] = _xavier_linear(ks[11], W // 2, 3)
    return p


# ----------------------------------------------------------------------------
# Full forward pass
# ----------------------------------------------------------------------------
def mipnerf_forward(params, cfg, ray_o, ray_d, fg_t_vals, bg_z_vals, fg_mean, fg_var):
    R = ray_o.shape[0]
    N = cfg['num_samples']

    # --- foreground: integrated positional encoding, sample-major (N, R, Din) ---
    scales_fg = 2.0 ** jnp.arange(cfg['min_deg'], cfg['max_deg'], dtype=jnp.float32)
    fg_enc, _ = positional_encoding(jnp.swapaxes(fg_mean, 0, 1), scales_fg,
                                    jnp.swapaxes(fg_var, 0, 1))        # (N, R, Din)

    # --- per-ray viewdir features (NOT duplicated over samples) ---
    viewdirs = ray_d / jnp.linalg.norm(ray_d, axis=-1, keepdims=True)
    scales_vd = 2.0 ** jnp.arange(cfg['vd_min_deg'], cfg['vd_max_deg'], dtype=jnp.float32)
    fg_vd = jnp.concatenate([positional_encoding(viewdirs, scales_vd), viewdirs],
                            axis=-1)                                    # (R, Dvd)

    # --- fused foreground MLP (Pallas) ---
    fg_raw_density, fg_raw_rgb = fg_mlp_pallas(fg_enc, fg_vd, params['fg'])

    fg_rgb = fg_raw_rgb * (1 + 2 * cfg['rgb_padding']) - cfg['rgb_padding']
    fg_density = jax.nn.softplus(fg_raw_density + cfg['density_bias'])

    (fg_comp_rgb, _fg_distance, _fg_acc, fg_weights, _fg_alpha,
     bg_lambda) = volumetric_rendering(fg_rgb, fg_density, fg_t_vals, ray_d,
                                       cfg['white_bkgd'])

    # --- background (NeRF++) ---
    K = bg_z_vals.shape[-1]
    bg_ray_o = jnp.broadcast_to(ray_o[..., None, :], (R, K, 3))
    bg_ray_d = jnp.broadcast_to(ray_d[..., None, :], (R, K, 3))
    bg_pts, _ = depth2pts_outside(bg_ray_o, bg_ray_d, bg_z_vals)        # (R, K, 4)

    # flip along the sample axis (viewdir features are constant along samples,
    # so their flip is a no-op and they stay per-ray).
    bg_pts = jnp.flip(bg_pts, axis=-2)
    bg_z_vals = jnp.flip(bg_z_vals, axis=-1)
    bg_dists = bg_z_vals[..., :-1] - bg_z_vals[..., 1:]
    bg_dists = jnp.concatenate(
        [bg_dists, HUGE_NUMBER * jnp.ones_like(bg_dists[..., 0:1])], axis=-1)

    pos_feat = embedder(jnp.swapaxes(bg_pts, 0, 1),
                        cfg['bg_pos_nfreq'], cfg['bg_pos_nfreq'] - 1)   # (K, R, Dpos)
    vd_feat = embedder(viewdirs, cfg['bg_vd_nfreq'], cfg['bg_vd_nfreq'] - 1)  # (R, Dvd)

    bg_sigma, bg_rgb = bg_mlp_pallas(pos_feat, vd_feat, params['bg'])   # (R,K), (R,K,3)

    bg_alpha = 1.0 - jnp.exp(-bg_sigma * bg_dists)
    T = jnp.cumprod(1.0 - bg_alpha + TINY_NUMBER, axis=-1)[..., :-1]
    T = jnp.concatenate([jnp.ones_like(T[..., 0:1]), T], axis=-1)
    bg_weights = bg_alpha * T
    bg_rgb_map = jnp.sum(bg_weights[..., None] * bg_rgb, axis=-2)
    bg_depth_map = jnp.sum(bg_weights * bg_z_vals, axis=-1)
    bg_rgb_map = bg_lambda[..., None] * bg_rgb_map
    bg_depth_map = bg_lambda * bg_depth_map

    rgb_map = fg_comp_rgb + bg_rgb_map
    return OrderedDict([('rgb', rgb_map),
                        ('fg_weights', fg_weights),
                        ('bg_weights', bg_weights),
                        ('fg_rgb', fg_comp_rgb),
                        ('bg_rgb', bg_rgb_map),
                        ('bg_depth', bg_depth_map),
                        ('bg_lambda', bg_lambda)])


# ----------------------------------------------------------------------------
if __name__ == "__main__":
    # small config consistent with the module's __init__
    cfg = dict(num_samples=16, hidden=32, netwidth=32,
               min_deg=0, max_deg=4, vd_min_deg=0, vd_max_deg=2,
               rgb_padding=0.001, density_bias=-1.0, white_bkgd=False,
               bg_pos_nfreq=4, bg_vd_nfreq=2)
    density_input = (cfg['max_deg'] - cfg['min_deg']) * 3 * 2          # 24
    rgb_input = 3 + (cfg['vd_max_deg'] - cfg['vd_min_deg']) * 3 * 2    # 15
    bg_pos_dim = 4 + 4 * cfg['bg_pos_nfreq'] * 2                       # 36
    bg_vd_dim = 3 + 3 * cfg['bg_vd_nfreq'] * 2                         # 15

    root = jax.random.PRNGKey(0)
    k_fg, k_bg, k1, k2, k3, k4 = jax.random.split(root, 6)
    params = {
        'fg': init_fg_params(k_fg, density_input, cfg['hidden'], rgb_input,
                             cfg['num_samples']),
        'bg': init_bg_params(k_bg, bg_pos_dim, bg_vd_dim, cfg['netwidth']),
    }

    R, N, K = 8, cfg['num_samples'], 16
    ray_o = 0.1 * jax.random.uniform(k1, (R, 3), jnp.float32, -1.0, 1.0)   # inside unit sphere
    ray_d = jax.random.normal(k2, (R, 3), jnp.float32)
    fg_t_vals = jnp.broadcast_to(jnp.linspace(2.0, 6.0, N + 1, dtype=jnp.float32),
                                 (R, N + 1))
    bg_z_vals = jnp.broadcast_to(jnp.linspace(0.01, 0.99, K, dtype=jnp.float32),
                                 (R, K))
    fg_mean = jax.random.normal(k3, (R, N, 3), jnp.float32)
    fg_var = 0.01 * jax.random.uniform(k4, (R, N, 3), jnp.float32, 0.1, 1.0)

    out = mipnerf_forward(params, cfg, ray_o, ray_d, fg_t_vals, bg_z_vals,
                          fg_mean, fg_var)
    jax.block_until_ready(out['rgb'])
    assert out['rgb'].shape == (R, 3)
    assert out['fg_weights'].shape == (R, N)
    assert out['bg_weights'].shape == (R, K)
    assert out['bg_lambda'].shape == (R,)
    assert bool(jnp.all(jnp.isfinite(out['rgb'])))
    print("KERNEL_OK")
</pallas_src>

<mosaic_0001>
module attributes {stable_mosaic.version = 11 : i64} {
  func.func @_fg_mlp_kernel(%arg0: i32, %arg1: i32, %arg2: memref<1x8x24xf32, #tpu.memory_space<vmem>>, %arg3: memref<8x15xf32, #tpu.memory_space<vmem>>, %arg4: memref<24x32xbf16, #tpu.memory_space<vmem>>, %arg5: memref<1x32xf32, #tpu.memory_space<vmem>>, %arg6: memref<32x32xbf16, #tpu.memory_space<vmem>>, %arg7: memref<1x32xf32, #tpu.memory_space<vmem>>, %arg8: memref<32x32xbf16, #tpu.memory_space<vmem>>, %arg9: memref<1x32xf32, #tpu.memory_space<vmem>>, %arg10: memref<32x32xbf16, #tpu.memory_space<vmem>>, %arg11: memref<1x32xf32, #tpu.memory_space<vmem>>, %arg12: memref<32x32xbf16, #tpu.memory_space<vmem>>, %arg13: memref<24x32xbf16, #tpu.memory_space<vmem>>, %arg14: memref<1x32xf32, #tpu.memory_space<vmem>>, %arg15: memref<32x32xbf16, #tpu.memory_space<vmem>>, %arg16: memref<1x32xf32, #tpu.memory_space<vmem>>, %arg17: memref<32x32xbf16, #tpu.memory_space<vmem>>, %arg18: memref<1x32xf32, #tpu.memory_space<vmem>>, %arg19: memref<32x32xbf16, #tpu.memory_space<vmem>>, %arg20: memref<1x32xf32, #tpu.memory_space<vmem>>, %arg21: memref<32x33xbf16, #tpu.memory_space<vmem>>, %arg22: memref<1x33xf32, #tpu.memory_space<vmem>>, %arg23: memref<32x16xbf16, #tpu.memory_space<vmem>>, %arg24: memref<15x16xbf16, #tpu.memory_space<vmem>>, %arg25: memref<1x16xf32, #tpu.memory_space<vmem>>, %arg26: memref<16x3xbf16, #tpu.memory_space<vmem>>, %arg27: memref<1x3xf32, #tpu.memory_space<vmem>>, %arg28: memref<1x8x4xf32, #tpu.memory_space<vmem>>) attributes {dimension_semantics = [#tpu.dimension_semantics<parallel>, #tpu.dimension_semantics<parallel>], iteration_bounds = array<i64: 1, 16>, scalar_prefetch = 0 : i64, scratch_operands = 0 : i64, tpu.core_type = #tpu.core_type<tc>, window_params = [{transform_indices = @transform_0, window_bounds = array<i64: 1, 8, 24>}, {transform_indices = @transform_1, window_bounds = array<i64: 8, 15>}, {pipeline_mode = #tpu.pipeline_mode<synchronous>, transform_indices = @transform_2, window_bounds = array<i64: 24, 32>}, {pipeline_mode = #tpu.pipeline_mode<synchronous>, transform_indices = @transform_3, window_bounds = array<i64: 1, 32>}, {pipeline_mode = #tpu.pipeline_mode<synchronous>, transform_indices = @transform_4, window_bounds = array<i64: 32, 32>}, {pipeline_mode = #tpu.pipeline_mode<synchronous>, transform_indices = @transform_5, window_bounds = array<i64: 1, 32>}, {pipeline_mode = #tpu.pipeline_mode<synchronous>, transform_indices = @transform_6, window_bounds = array<i64: 32, 32>}, {pipeline_mode = #tpu.pipeline_mode<synchronous>, transform_indices = @transform_7, window_bounds = array<i64: 1, 32>}, {pipeline_mode = #tpu.pipeline_mode<synchronous>, transform_indices = @transform_8, window_bounds = array<i64: 32, 32>}, {pipeline_mode = #tpu.pipeline_mode<synchronous>, transform_indices = @transform_9, window_bounds = array<i64: 1, 32>}, {pipeline_mode = #tpu.pipeline_mode<synchronous>, transform_indices = @transform_10, window_bounds = array<i64: 32, 32>}, {pipeline_mode = #tpu.pipeline_mode<synchronous>, transform_indices = @transform_11, window_bounds = array<i64: 24, 32>}, {pipeline_mode = #tpu.pipeline_mode<synchronous>, transform_indices = @transform_12, window_bounds = array<i64: 1, 32>}, {pipeline_mode = #tpu.pipeline_mode<synchronous>, transform_indices = @transform_13, window_bounds = array<i64: 32, 32>}, {pipeline_mode = #tpu.pipeline_mode<synchronous>, transform_indices = @transform_14, window_bounds = array<i64: 1, 32>}, {pipeline_mode = #tpu.pipeline_mode<synchronous>, transform_indices = @transform_15, window_bounds = array<i64: 32, 32>}, {pipeline_mode = #tpu.pipeline_mode<synchronous>, transform_indices = @transform_16, window_bounds = array<i64: 1, 32>}, {pipeline_mode = #tpu.pipeline_mode<synchronous>, transform_indices = @transform_17, window_bounds = array<i64: 32, 32>}, {pipeline_mode = #tpu.pipeline_mode<synchronous>, transform_indices = @transform_18, window_bounds = array<i64: 1, 32>}, {pipeline_mode = #tpu.pipeline_mode<synchronous>, transform_indices = @transform_19, window_bounds = array<i64: 32, 33>}, {pipeline_mode = #tpu.pipeline_mode<synchronous>, transform_indices = @transform_20, window_bounds = array<i64: 1, 33>}, {pipeline_mode = #tpu.pipeline_mode<synchronous>, transform_indices = @transform_21, window_bounds = array<i64: 32, 16>}, {pipeline_mode = #tpu.pipeline_mode<synchronous>, transform_indices = @transform_22, window_bounds = array<i64: 15, 16>}, {pipeline_mode = #tpu.pipeline_mode<synchronous>, transform_indices = @transform_23, window_bounds = array<i64: 1, 16>}, {pipeline_mode = #tpu.pipeline_mode<synchronous>, transform_indices = @transform_24, window_bounds = array<i64: 16, 3>}, {pipeline_mode = #tpu.pipeline_mode<synchronous>, transform_indices = @transform_25, window_bounds = array<i64: 1, 3>}, {transform_indices = @transform_26, window_bounds = array<i64: 1, 8, 4>}]} {
    %c0 = arith.constant 0 : index
    %c0_0 = arith.constant 0 : index
    %c0_1 = arith.constant 0 : index
    %0 = vector.load %arg2[%c0, %c0_0, %c0_1] : memref<1x8x24xf32, #tpu.memory_space<vmem>>, vector<1x8x24xf32>
    %1 = vector.shape_cast %0 : vector<1x8x24xf32> to vector<8x24xf32>
    %c0_2 = arith.constant 0 : index
    %c0_3 = arith.constant 0 : index
    %2 = vector.load %arg3[%c0_2, %c0_3] : memref<8x15xf32, #tpu.memory_space<vmem>>, vector<8x15xf32>
    %3 = arith.truncf %1 : vector<8x24xf32> to vector<8x24xbf16>
    %c0_4 = arith.constant 0 : index
    %c0_5 = arith.constant 0 : index
    %4 = vector.load %arg4[%c0_4, %c0_5] : memref<24x32xbf16, #tpu.memory_space<vmem>>, vector<24x32xbf16>
    %cst = arith.constant dense<0.000000e+00> : vector<8x32xf32>
    %5 = tpu.matmul %3, %4, %cst {dimension_numbers = #tpu.dot_dimension_numbers<[1], [0], [0], [1], [0, 0, 1, 1], [], []>} : vector<8x24xbf16>, vector<24x32xbf16>, vector<8x32xf32> -> vector<8x32xf32>
    %c0_6 = arith.constant 0 : index
    %c0_7 = arith.constant 0 : index
    %6 = vector.load %arg5[%c0_6, %c0_7] : memref<1x32xf32, #tpu.memory_space<vmem>>, vector<1x32xf32>
    %7 = vector.broadcast %6 : vector<1x32xf32> to vector<8x32xf32>
    %8 = arith.addf %5, %7 : vector<8x32xf32>
    %cst_8 = arith.constant 0.000000e+00 : f32
    %9 = vector.broadcast %cst_8 : f32 to vector<8x32xf32>
    %10 = arith.maximumf %8, %9 : vector<8x32xf32>
    %11 = arith.truncf %10 : vector<8x32xf32> to vector<8x32xbf16>
    %c0_9 = arith.constant 0 : index
    %c0_10 = arith.constant 0 : index
    %12 = vector.load %arg6[%c0_9, %c0_10] : memref<32x32xbf16, #tpu.memory_space<vmem>>, vector<32x32xbf16>
    %cst_11 = arith.constant dense<0.000000e+00> : vector<8x32xf32>
    %13 = tpu.matmul %11, %12, %cst_11 {dimension_numbers = #tpu.dot_dimension_numbers<[1], [0], [0], [1], [0, 0, 1, 1], [], []>} : vector<8x32xbf16>, vector<32x32xbf16>, vector<8x32xf32> -> vector<8x32xf32>
    %c0_12 = arith.constant 0 : index
    %c0_13 = arith.constant 0 : index
    %14 = vector.load %arg7[%c0_12, %c0_13] : memref<1x32xf32, #tpu.memory_space<vmem>>, vector<1x32xf32>
    %15 = vector.broadcast %14 : vector<1x32xf32> to vector<8x32xf32>
    %16 = arith.addf %13, %15 : vector<8x32xf32>
    %cst_14 = arith.constant 0.000000e+00 : f32
    %17 = vector.broadcast %cst_14 : f32 to vector<8x32xf32>
    %18 = arith.maximumf %16, %17 : vector<8x32xf32>
    %19 = arith.truncf %18 : vector<8x32xf32> to vector<8x32xbf16>
    %c0_15 = arith.constant 0 : index
    %c0_16 = arith.constant 0 : index
    %20 = vector.load %arg8[%c0_15, %c0_16] : memref<32x32xbf16, #tpu.memory_space<vmem>>, vector<32x32xbf16>
    %cst_17 = arith.constant dense<0.000000e+00> : vector<8x32xf32>
    %21 = tpu.matmul %19, %20, %cst_17 {dimension_numbers = #tpu.dot_dimension_numbers<[1], [0], [0], [1], [0, 0, 1, 1], [], []>} : vector<8x32xbf16>, vector<32x32xbf16>, vector<8x32xf32> -> vector<8x32xf32>
    %c0_18 = arith.constant 0 : index
    %c0_19 = arith.constant 0 : index
    %22 = vector.load %arg9[%c0_18, %c0_19] : memref<1x32xf32, #tpu.memory_space<vmem>>, vector<1x32xf32>
    %23 = vector.broadcast %22 : vector<1x32xf32> to vector<8x32xf32>
    %24 = arith.addf %21, %23 : vector<8x32xf32>
    %cst_20 = arith.constant 0.000000e+00 : f32
    %25 = vector.broadcast %cst_20 : f32 to vector<8x32xf32>
    %26 = arith.maximumf %24, %25 : vector<8x32xf32>
    %27 = arith.truncf %26 : vector<8x32xf32> to vector<8x32xbf16>
    %c0_21 = arith.constant 0 : index
    %c0_22 = arith.constant 0 : index
    %28 = vector.load %arg10[%c0_21, %c0_22] : memref<32x32xbf16, #tpu.memory_space<vmem>>, vector<32x32xbf16>
    %cst_23 = arith.constant dense<0.000000e+00> : vector<8x32xf32>
    %29 = tpu.matmul %27, %28, %cst_23 {dimension_numbers = #tpu.dot_dimension_numbers<[1], [0], [0], [1], [0, 0, 1, 1], [], []>} : vector<8x32xbf16>, vector<32x32xbf16>, vector<8x32xf32> -> vector<8x32xf32>
    %c0_24 = arith.constant 0 : index
    %c0_25 = arith.constant 0 : index
    %30 = vector.load %arg11[%c0_24, %c0_25] : memref<1x32xf32, #tpu.memory_space<vmem>>, vector<1x32xf32>
    %31 = vector.broadcast %30 : vector<1x32xf32> to vector<8x32xf32>
    %32 = arith.addf %29, %31 : vector<8x32xf32>
    %cst_26 = arith.constant 0.000000e+00 : f32
    %33 = vector.broadcast %cst_26 : f32 to vector<8x32xf32>
    %34 = arith.maximumf %32, %33 : vector<8x32xf32>
    %35 = arith.truncf %34 : vector<8x32xf32> to vector<8x32xbf16>
    %c0_27 = arith.constant 0 : index
    %c0_28 = arith.constant 0 : index
    %36 = vector.load %arg12[%c0_27, %c0_28] : memref<32x32xbf16, #tpu.memory_space<vmem>>, vector<32x32xbf16>
    %cst_29 = arith.constant dense<0.000000e+00> : vector<8x32xf32>
    %37 = tpu.matmul %35, %36, %cst_29 {dimension_numbers = #tpu.dot_dimension_numbers<[1], [0], [0], [1], [0, 0, 1, 1], [], []>} : vector<8x32xbf16>, vector<32x32xbf16>, vector<8x32xf32> -> vector<8x32xf32>
    %38 = arith.truncf %1 : vector<8x24xf32> to vector<8x24xbf16>
    %c0_30 = arith.constant 0 : index
    %c0_31 = arith.constant 0 : index
    %39 = vector.load %arg13[%c0_30, %c0_31] : memref<24x32xbf16, #tpu.memory_space<vmem>>, vector<24x32xbf16>
    %cst_32 = arith.constant dense<0.000000e+00> : vector<8x32xf32>
    %40 = tpu.matmul %38, %39, %cst_32 {dimension_numbers = #tpu.dot_dimension_numbers<[1], [0], [0], [1], [0, 0, 1, 1], [], []>} : vector<8x24xbf16>, vector<24x32xbf16>, vector<8x32xf32> -> vector<8x32xf32>
    %41 = arith.addf %37, %40 : vector<8x32xf32>
    %c0_33 = arith.constant 0 : index
    %c0_34 = arith.constant 0 : index
    %42 = vector.load %arg14[%c0_33, %c0_34] : memref<1x32xf32, #tpu.memory_space<vmem>>, vector<1x32xf32>
    %43 = vector.broadcast %42 : vector<1x32xf32> to vector<8x32xf32>
    %44 = arith.addf %41, %43 : vector<8x32xf32>
    %cst_35 = arith.constant 0.000000e+00 : f32
    %45 = vector.broadcast %cst_35 : f32 to vector<8x32xf32>
    %46 = arith.maximumf %44, %45 : vector<8x32xf32>
    %47 = arith.truncf %46 : vector<8x32xf32> to vector<8x32xbf16>
    %c0_36 = arith.constant 0 : index
    %c0_37 = arith.constant 0 : index
    %48 = vector.load %arg15[%c0_36, %c0_37] : memref<32x32xbf16, #tpu.memory_space<vmem>>, vector<32x32xbf16>
    %cst_38 = arith.constant dense<0.000000e+00> : vector<8x32xf32>
    %49 = tpu.matmul %47, %48, %cst_38 {dimension_numbers = #tpu.dot_dimension_numbers<[1], [0], [0], [1], [0, 0, 1, 1], [], []>} : vector<8x32xbf16>, vector<32x32xbf16>, vector<8x32xf32> -> vector<8x32xf32>
    %c0_39 = arith.constant 0 : index
    %c0_40 = arith.constant 0 : index
    %50 = vector.load %arg16[%c0_39, %c0_40] : memref<1x32xf32, #tpu.memory_space<vmem>>, vector<1x32xf32>
    %51 = vector.broadcast %50 : vector<1x32xf32> to vector<8x32xf32>
    %52 = arith.addf %49, %51 : vector<8x32xf32>
    %cst_41 = arith.constant 0.000000e+00 : f32
    %53 = vector.broadcast %cst_41 : f32 to vector<8x32xf32>
    %54 = arith.maximumf %52, %53 : vector<8x32xf32>
    %55 = arith.truncf %54 : vector<8x32xf32> to vector<8x32xbf16>
    %c0_42 = arith.constant 0 : index
    %c0_43 = arith.constant 0 : index
    %56 = vector.load %arg17[%c0_42, %c0_43] : memref<32x32xbf16, #tpu.memory_space<vmem>>, vector<32x32xbf16>
    %cst_44 = arith.constant dense<0.000000e+00> : vector<8x32xf32>
    %57 = tpu.matmul %55, %56, %cst_44 {dimension_numbers = #tpu.dot_dimension_numbers<[1], [0], [0], [1], [0, 0, 1, 1], [], []>} : vector<8x32xbf16>, vector<32x32xbf16>, vector<8x32xf32> -> vector<8x32xf32>
    %c0_45 = arith.constant 0 : index
    %c0_46 = arith.constant 0 : index
    %58 = vector.load %arg18[%c0_45, %c0_46] : memref<1x32xf32, #tpu.memory_space<vmem>>, vector<1x32xf32>
    %59 = vector.broadcast %58 : vector<1x32xf32> to vector<8x32xf32>
    %60 = arith.addf %57, %59 : vector<8x32xf32>
    %cst_47 = arith.constant 0.000000e+00 : f32
    %61 = vector.broadcast %cst_47 : f32 to vector<8x32xf32>
    %62 = arith.maximumf %60, %61 : vector<8x32xf32>
    %63 = arith.truncf %62 : vector<8x32xf32> to vector<8x32xbf16>
    %c0_48 = arith.constant 0 : index
    %c0_49 = arith.constant 0 : index
    %64 = vector.load %arg19[%c0_48, %c0_49] : memref<32x32xbf16, #tpu.memory_space<vmem>>, vector<32x32xbf16>
    %cst_50 = arith.constant dense<0.000000e+00> : vector<8x32xf32>
    %65 = tpu.matmul %63, %64, %cst_50 {dimension_numbers = #tpu.dot_dimension_numbers<[1], [0], [0], [1], [0, 0, 1, 1], [], []>} : vector<8x32xbf16>, vector<32x32xbf16>, vector<8x32xf32> -> vector<8x32xf32>
    %c0_51 = arith.constant 0 : index
    %c0_52 = arith.constant 0 : index
    %66 = vector.load %arg20[%c0_51, %c0_52] : memref<1x32xf32, #tpu.memory_space<vmem>>, vector<1x32xf32>
    %67 = vector.broadcast %66 : vector<1x32xf32> to vector<8x32xf32>
    %68 = arith.addf %65, %67 : vector<8x32xf32>
    %cst_53 = arith.constant 0.000000e+00 : f32
    %69 = vector.broadcast %cst_53 : f32 to vector<8x32xf32>
    %70 = arith.maximumf %68, %69 : vector<8x32xf32>
    %71 = arith.truncf %70 : vector<8x32xf32> to vector<8x32xbf16>
    %c0_54 = arith.constant 0 : index
    %c0_55 = arith.constant 0 : index
    %72 = vector.load %arg21[%c0_54, %c0_55] : memref<32x33xbf16, #tpu.memory_space<vmem>>, vector<32x33xbf16>
    %cst_56 = arith.constant dense<0.000000e+00> : vector<8x33xf32>
    %73 = tpu.matmul %71, %72, %cst_56 {dimension_numbers = #tpu.dot_dimension_numbers<[1], [0], [0], [1], [0, 0, 1, 1], [], []>} : vector<8x32xbf16>, vector<32x33xbf16>, vector<8x33xf32> -> vector<8x33xf32>
    %c0_57 = arith.constant 0 : index
    %c0_58 = arith.constant 0 : index
    %74 = vector.load %arg22[%c0_57, %c0_58] : memref<1x33xf32, #tpu.memory_space<vmem>>, vector<1x33xf32>
    %75 = vector.broadcast %74 : vector<1x33xf32> to vector<8x33xf32>
    %76 = arith.addf %73, %75 : vector<8x33xf32>
    %77 = vector.extract_strided_slice %76 {offsets = [0, 0], sizes = [8, 32], strides = [1, 1]} : vector<8x33xf32> to vector<8x32xf32>
    %78 = vector.extract_strided_slice %76 {offsets = [0, 32], sizes = [8, 1], strides = [1, 1]} : vector<8x33xf32> to vector<8x1xf32>
    %79 = arith.truncf %77 : vector<8x32xf32> to vector<8x32xbf16>
    %c0_59 = arith.constant 0 : index
    %c0_60 = arith.constant 0 : index
    %80 = vector.load %arg23[%c0_59, %c0_60] : memref<32x16xbf16, #tpu.memory_space<vmem>>, vector<32x16xbf16>
    %cst_61 = arith.constant dense<0.000000e+00> : vector<8x16xf32>
    %81 = tpu.matmul %79, %80, %cst_61 {dimension_numbers = #tpu.dot_dimension_numbers<[1], [0], [0], [1], [0, 0, 1, 1], [], []>} : vector<8x32xbf16>, vector<32x16xbf16>, vector<8x16xf32> -> vector<8x16xf32>
    %82 = arith.truncf %2 : vector<8x15xf32> to vector<8x15xbf16>
    %c0_62 = arith.constant 0 : index
    %c0_63 = arith.constant 0 : index
    %83 = vector.load %arg24[%c0_62, %c0_63] : memref<15x16xbf16, #tpu.memory_space<vmem>>, vector<15x16xbf16>
    %cst_64 = arith.constant dense<0.000000e+00> : vector<8x16xf32>
    %84 = tpu.matmul %82, %83, %cst_64 {dimension_numbers = #tpu.dot_dimension_numbers<[1], [0], [0], [1], [0, 0, 1, 1], [], []>} : vector<8x15xbf16>, vector<15x16xbf16>, vector<8x16xf32> -> vector<8x16xf32>
    %85 = arith.addf %81, %84 : vector<8x16xf32>
    %c0_65 = arith.constant 0 : index
    %c0_66 = arith.constant 0 : index
    %86 = vector.load %arg25[%c0_65, %c0_66] : memref<1x16xf32, #tpu.memory_space<vmem>>, vector<1x16xf32>
    %87 = vector.broadcast %86 : vector<1x16xf32> to vector<8x16xf32>
    %88 = arith.addf %85, %87 : vector<8x16xf32>
    %cst_67 = arith.constant 0.000000e+00 : f32
    %89 = vector.broadcast %cst_67 : f32 to vector<8x16xf32>
    %90 = arith.maximumf %88, %89 : vector<8x16xf32>
    %91 = arith.truncf %90 : vector<8x16xf32> to vector<8x16xbf16>
    %c0_68 = arith.constant 0 : index
    %c0_69 = arith.constant 0 : index
    %92 = vector.load %arg26[%c0_68, %c0_69] : memref<16x3xbf16, #tpu.memory_space<vmem>>, vector<16x3xbf16>
    %cst_70 = arith.constant dense<0.000000e+00> : vector<8x3xf32>
    %93 = tpu.matmul %91, %92, %cst_70 {dimension_numbers = #tpu.dot_dimension_numbers<[1], [0], [0], [1], [0, 0, 1, 1], [], []>} : vector<8x16xbf16>, vector<16x3xbf16>, vector<8x3xf32> -> vector<8x3xf32>
    %c0_71 = arith.constant 0 : index
    %c0_72 = arith.constant 0 : index
    %94 = vector.load %arg27[%c0_71, %c0_72] : memref<1x3xf32, #tpu.memory_space<vmem>>, vector<1x3xf32>
    %95 = vector.broadcast %94 : vector<1x3xf32> to vector<8x3xf32>
    %96 = arith.addf %93, %95 : vector<8x3xf32>
    %97 = tpu.concatenate %78, %96 in 1 : vector<8x1xf32>, vector<8x3xf32> -> vector<8x4xf32>
    %c0_73 = arith.constant 0 : index
    %c0_74 = arith.constant 0 : index
    %c0_75 = arith.constant 0 : index
    %98 = vector.load %arg28[%c0_73, %c0_74, %c0_75] : memref<1x8x4xf32, #tpu.memory_space<vmem>>, vector<1x8x4xf32>
    %99 = vector.shape_cast %98 : vector<1x8x4xf32> to vector<8x4xf32>
    %100 = vector.shape_cast %97 : vector<8x4xf32> to vector<1x8x4xf32>
    tpu.vector_store %arg28[%c0_73, %c0_74, %c0_75], %100 {strides = array<i32>} : memref<1x8x4xf32, #tpu.memory_space<vmem>>, vector<1x8x4xf32>,
    return
  }
  func.func @transform_0(%arg0: i32, %arg1: i32) -> (i32, i32, i32) {
    %c0_i32 = arith.constant 0 : i32
    %c0_i32_0 = arith.constant 0 : i32
    return %arg1, %arg0, %c0_i32 : i32, i32, i32
  }
  func.func @transform_1(%arg0: i32, %arg1: i32) -> (i32, i32) {
    %c0_i32 = arith.constant 0 : i32
    %c0_i32_0 = arith.constant 0 : i32
    return %arg0, %c0_i32 : i32, i32
  }
  func.func @transform_2(%arg0: i32, %arg1: i32) -> (i32, i32) {
    %c0_i32 = arith.constant 0 : i32
    %c0_i32_0 = arith.constant 0 : i32
    %c0_i32_1 = arith.constant 0 : i32
    return %c0_i32, %c0_i32_0 : i32, i32
  }
  func.func @transform_3(%arg0: i32, %arg1: i32) -> (i32, i32) {
    %c0_i32 = arith.constant 0 : i32
    %c0_i32_0 = arith.constant 0 : i32
    %c0_i32_1 = arith.constant 0 : i32
    return %c0_i32, %c0_i32_0 : i32, i32
  }
  func.func @transform_4(%arg0: i32, %arg1: i32) -> (i32, i32) {
    %c0_i32 = arith.constant 0 : i32
    %c0_i32_0 = arith.constant 0 : i32
    %c0_i32_1 = arith.constant 0 : i32
    return %c0_i32, %c0_i32_0 : i32, i32
  }
  func.func @transform_5(%arg0: i32, %arg1: i32) -> (i32, i32) {
    %c0_i32 = arith.constant 0 : i32
    %c0_i32_0 = arith.constant 0 : i32
    %c0_i32_1 = arith.constant 0 : i32
    return %c0_i32, %c0_i32_0 : i32, i32
  }
  func.func @transform_6(%arg0: i32, %arg1: i32) -> (i32, i32) {
    %c0_i32 = arith.constant 0 : i32
    %c0_i32_0 = arith.constant 0 : i32
    %c0_i32_1 = arith.constant 0 : i32
    return %c0_i32, %c0_i32_0 : i32, i32
  }
  func.func @transform_7(%arg0: i32, %arg1: i32) -> (i32, i32) {
    %c0_i32 = arith.constant 0 : i32
    %c0_i32_0 = arith.constant 0 : i32
    %c0_i32_1 = arith.constant 0 : i32
    return %c0_i32, %c0_i32_0 : i32, i32
  }
  func.func @transform_8(%arg0: i32, %arg1: i32) -> (i32, i32) {
    %c0_i32 = arith.constant 0 : i32
    %c0_i32_0 = arith.constant 0 : i32
    %c0_i32_1 = arith.constant 0 : i32
    return %c0_i32, %c0_i32_0 : i32, i32
  }
  func.func @transform_9(%arg0: i32, %arg1: i32) -> (i32, i32) {
    %c0_i32 = arith.constant 0 : i32
    %c0_i32_0 = arith.constant 0 : i32
    %c0_i32_1 = arith.constant 0 : i32
    return %c0_i32, %c0_i32_0 : i32, i32
  }
  func.func @transform_10(%arg0: i32, %arg1: i32) -> (i32, i32) {
    %c0_i32 = arith.constant 0 : i32
    %c0_i32_0 = arith.constant 0 : i32
    %c0_i32_1 = arith.constant 0 : i32
    return %c0_i32, %c0_i32_0 : i32, i32
  }
  func.func @transform_11(%arg0: i32, %arg1: i32) -> (i32, i32) {
    %c0_i32 = arith.constant 0 : i32
    %c0_i32_0 = arith.constant 0 : i32
    %c0_i32_1 = arith.constant 0 : i32
    return %c0_i32, %c0_i32_0 : i32, i32
  }
  func.func @transform_12(%arg0: i32, %arg1: i32) -> (i32, i32) {
    %c0_i32 = arith.constant 0 : i32
    %c0_i32_0 = arith.constant 0 : i32
    %c0_i32_1 = arith.constant 0 : i32
    return %c0_i32, %c0_i32_0 : i32, i32
  }
  func.func @transform_13(%arg0: i32, %arg1: i32) -> (i32, i32) {
    %c0_i32 = arith.constant 0 : i32
    %c0_i32_0 = arith.constant 0 : i32
    %c0_i32_1 = arith.constant 0 : i32
    return %c0_i32, %c0_i32_0 : i32, i32
  }
  func.func @transform_14(%arg0: i32, %arg1: i32) -> (i32, i32) {
    %c0_i32 = arith.constant 0 : i32
    %c0_i32_0 = arith.constant 0 : i32
    %c0_i32_1 = arith.constant 0 : i32
    return %c0_i32, %c0_i32_0 : i32, i32
  }
  func.func @transform_15(%arg0: i32, %arg1: i32) -> (i32, i32) {
    %c0_i32 = arith.constant 0 : i32
    %c0_i32_0 = arith.constant 0 : i32
    %c0_i32_1 = arith.constant 0 : i32
    return %c0_i32, %c0_i32_0 : i32, i32
  }
  func.func @transform_16(%arg0: i32, %arg1: i32) -> (i32, i32) {
    %c0_i32 = arith.constant 0 : i32
    %c0_i32_0 = arith.constant 0 : i32
    %c0_i32_1 = arith.constant 0 : i32
    return %c0_i32, %c0_i32_0 : i32, i32
  }
  func.func @transform_17(%arg0: i32, %arg1: i32) -> (i32, i32) {
    %c0_i32 = arith.constant 0 : i32
    %c0_i32_0 = arith.constant 0 : i32
    %c0_i32_1 = arith.constant 0 : i32
    return %c0_i32, %c0_i32_0 : i32, i32
  }
  func.func @transform_18(%arg0: i32, %arg1: i32) -> (i32, i32) {
    %c0_i32 = arith.constant 0 : i32
    %c0_i32_0 = arith.constant 0 : i32
    %c0_i32_1 = arith.constant 0 : i32
    return %c0_i32, %c0_i32_0 : i32, i32
  }
  func.func @transform_19(%arg0: i32, %arg1: i32) -> (i32, i32) {
    %c0_i32 = arith.constant 0 : i32
    %c0_i32_0 = arith.constant 0 : i32
    %c0_i32_1 = arith.constant 0 : i32
    return %c0_i32, %c0_i32_0 : i32, i32
  }
  func.func @transform_20(%arg0: i32, %arg1: i32) -> (i32, i32) {
    %c0_i32 = arith.constant 0 : i32
    %c0_i32_0 = arith.constant 0 : i32
    %c0_i32_1 = arith.constant 0 : i32
    return %c0_i32, %c0_i32_0 : i32, i32
  }
  func.func @transform_21(%arg0: i32, %arg1: i32) -> (i32, i32) {
    %c0_i32 = arith.constant 0 : i32
    %c0_i32_0 = arith.constant 0 : i32
    %c0_i32_1 = arith.constant 0 : i32
    return %c0_i32, %c0_i32_0 : i32, i32
  }
  func.func @transform_22(%arg0: i32, %arg1: i32) -> (i32, i32) {
    %c0_i32 = arith.constant 0 : i32
    %c0_i32_0 = arith.constant 0 : i32
    %c0_i32_1 = arith.constant 0 : i32
    return %c0_i32, %c0_i32_0 : i32, i32
  }
  func.func @transform_23(%arg0: i32, %arg1: i32) -> (i32, i32) {
    %c0_i32 = arith.constant 0 : i32
    %c0_i32_0 = arith.constant 0 : i32
    %c0_i32_1 = arith.constant 0 : i32
    return %c0_i32, %c0_i32_0 : i32, i32
  }
  func.func @transform_24(%arg0: i32, %arg1: i32) -> (i32, i32) {
    %c0_i32 = arith.constant 0 : i32
    %c0_i32_0 = arith.constant 0 : i32
    %c0_i32_1 = arith.constant 0 : i32
    return %c0_i32, %c0_i32_0 : i32, i32
  }
  func.func @transform_25(%arg0: i32, %arg1: i32) -> (i32, i32) {
    %c0_i32 = arith.constant 0 : i32
    %c0_i32_0 = arith.constant 0 : i32
    %c0_i32_1 = arith.constant 0 : i32
    return %c0_i32, %c0_i32_0 : i32, i32
  }
  func.func @transform_26(%arg0: i32, %arg1: i32) -> (i32, i32, i32) {
    %c0_i32 = arith.constant 0 : i32
    %c0_i32_0 = arith.constant 0 : i32
    return %arg1, %arg0, %c0_i32 : i32, i32, i32
  }
}

</mosaic_0001>

<llo_original>
// kernel: tpu_custom_call.1
$region0: #{tpu_custom_call.1}
  #allocation0 [shape = 'u32[]', space=smem, size = 0x4, offset = 0x4, fixed_abs, tag = 'smem constant byte address 0x4 - core index']
  #allocation1 [shape = 'u32[72,128]{1,0:T(1,128)}', space=vmem, size = 0x9000, scoped, tag = 'internal scratch']
  %s0 = inlined_call_operand.hbm [shape: f32[16,8,24], index: 0, kind: input, shape index: {}]
  %s1 = inlined_call_operand.vmem [shape: f32[8,15], index: 1, kind: input, shape index: {}]
  %s2 = inlined_call_operand.hbm [shape: bf16[24,32], index: 2, kind: input, shape index: {}]
  %s3 = inlined_call_operand.vmem [shape: f32[1,32], index: 3, kind: input, shape index: {}]
  %s4 = inlined_call_operand.vmem [shape: bf16[32,32], index: 4, kind: input, shape index: {}]
  %s5 = inlined_call_operand.vmem [shape: f32[1,32], index: 5, kind: input, shape index: {}]
  %s6 = inlined_call_operand.hbm [shape: bf16[32,32], index: 6, kind: input, shape index: {}]
  %s7 = inlined_call_operand.hbm [shape: f32[1,32], index: 7, kind: input, shape index: {}]
  %s8 = inlined_call_operand.hbm [shape: bf16[32,32], index: 8, kind: input, shape index: {}]
  %s9 = inlined_call_operand.hbm [shape: f32[1,32], index: 9, kind: input, shape index: {}]
  %s10 = inlined_call_operand.hbm [shape: bf16[32,32], index: 10, kind: input, shape index: {}]
  %s11 = inlined_call_operand.hbm [shape: bf16[24,32], index: 11, kind: input, shape index: {}]
  %s12 = inlined_call_operand.hbm [shape: f32[1,32], index: 12, kind: input, shape index: {}]
  %s13 = inlined_call_operand.hbm [shape: bf16[32,32], index: 13, kind: input, shape index: {}]
  %s14 = inlined_call_operand.hbm [shape: f32[1,32], index: 14, kind: input, shape index: {}]
  %s15 = inlined_call_operand.hbm [shape: bf16[32,32], index: 15, kind: input, shape index: {}]
  %s16 = inlined_call_operand.hbm [shape: f32[1,32], index: 16, kind: input, shape index: {}]
  %s17 = inlined_call_operand.hbm [shape: bf16[32,32], index: 17, kind: input, shape index: {}]
  %s18 = inlined_call_operand.hbm [shape: f32[1,32], index: 18, kind: input, shape index: {}]
  %s19 = inlined_call_operand.vmem [shape: bf16[32,33], index: 19, kind: input, shape index: {}]
  %s20 = inlined_call_operand.vmem [shape: f32[1,33], index: 20, kind: input, shape index: {}]
  %s21 = inlined_call_operand.vmem [shape: bf16[32,16], index: 21, kind: input, shape index: {}]
  %s22 = inlined_call_operand.hbm [shape: bf16[15,16], index: 22, kind: input, shape index: {}]
  %s23 = inlined_call_operand.vmem [shape: f32[1,16], index: 23, kind: input, shape index: {}]
  %s24 = inlined_call_operand.vmem [shape: bf16[16,3], index: 24, kind: input, shape index: {}]
  %s25 = inlined_call_operand.vmem [shape: f32[1,3], index: 25, kind: input, shape index: {}]
  %s26 = inlined_call_operand.vmem [shape: f32[16,8,4], index: 26, kind: output, shape index: {}]
  %s27 = sld [smem:[#allocation0]]
  $region201: #{tpu_custom_call.1} parent=0
    _
  %s29 = ssub.s32 1, %s27
  %s30 = scalar_select 0, %s29, %s27
  $region1: #{tpu_custom_call.1} parent=0
    #allocation2 [shape = 'u8[8192]{0}', space=vmem, size = 0x2000, scoped, tag = 'input window, operand 0']
    #allocation3 [shape = 's32[2]{0}', space=sflag, size = 0x8, scoped, tag = 'scoped memory for tpu_custom_call.1']
    #allocation4 [shape = 'u8[6144]{0}', space=vmem, size = 0x1800, scoped, tag = 'input window, operand 2, single buffered']
    #allocation5 [shape = 's32[1]{0}', space=sflag, size = 0x4, scoped, tag = 'scoped memory for tpu_custom_call.1']
    #allocation6 [shape = 'u8[8192]{0}', space=vmem, size = 0x2000, scoped, tag = 'input window, operand 6, single buffered']
    #allocation7 [shape = 'u8[512]{0}', space=vmem, size = 0x400, scoped, tag = 'input window, operand 7, single buffered']
    #allocation8 [shape = 's32[1]{0}', space=sflag, size = 0x4, scoped, tag = 'scoped memory for tpu_custom_call.1']
    #allocation9 [shape = 'u8[8192]{0}', space=vmem, size = 0x2000, scoped, tag = 'input window, operand 8, single buffered']
    #allocation10 [shape = 'u8[512]{0}', space=vmem, size = 0x400, scoped, tag = 'input window, operand 9, single buffered']
    #allocation11 [shape = 's32[1]{0}', space=sflag, size = 0x4, scoped, tag = 'scoped memory for tpu_custom_call.1']
    #allocation12 [shape = 'u8[8192]{0}', space=vmem, size = 0x2000, scoped, tag = 'input window, operand 10, single buffered']
    #allocation13 [shape = 'u8[6144]{0}', space=vmem, size = 0x1800, scoped, tag = 'input window, operand 11, single buffered']
    #allocation14 [shape = 's32[1]{0}', space=sflag, size = 0x4, scoped, tag = 'scoped memory for tpu_custom_call.1']
    #allocation15 [shape = 'u8[512]{0}', space=vmem, size = 0x400, scoped, tag = 'input window, operand 12, single buffered']
    #allocation16 [shape = 'u8[8192]{0}', space=vmem, size = 0x2000, scoped, tag = 'input window, operand 13, single buffered']
    #allocation17 [shape = 's32[1]{0}', space=sflag, size = 0x4, scoped, tag = 'scoped memory for tpu_custom_call.1']
    #allocation18 [shape = 'u8[512]{0}', space=vmem, size = 0x400, scoped, tag = 'input window, operand 14, single buffered']
    #allocation19 [shape = 'u8[8192]{0}', space=vmem, size = 0x2000, scoped, tag = 'input window, operand 15, single buffered']
    #allocation20 [shape = 's32[1]{0}', space=sflag, size = 0x4, scoped, tag = 'scoped memory for tpu_custom_call.1']
    #allocation21 [shape = 'u8[512]{0}', space=vmem, size = 0x400, scoped, tag = 'input window, operand 16, single buffered']
    #allocation22 [shape = 'u8[8192]{0}', space=vmem, size = 0x2000, scoped, tag = 'input window, operand 17, single buffered']
    #allocation23 [shape = 's32[1]{0}', space=sflag, size = 0x4, scoped, tag = 'scoped memory for tpu_custom_call.1']
    #allocation24 [shape = 'u8[512]{0}', space=vmem, size = 0x400, scoped, tag = 'input window, operand 18, single buffered']
    #allocation25 [shape = 'u8[4096]{0}', space=vmem, size = 0x1000, scoped, tag = 'input window, operand 22, single buffered']
    #allocation26 [shape = 's32[1]{0}', space=sflag, size = 0x4, scoped, tag = 'scoped memory for tpu_custom_call.1']
    %31 = vsyncpa [#allocation3], 0
    %s32 = scalar_lea.sflag [#allocation3], 1
    %33 = vsyncpa %s32, 0
    %34 = vsyncpa [#allocation5], 0
    %35 = vsyncpa [#allocation8], 0
    %36 = vsyncpa [#allocation11], 0
    %37 = vsyncpa [#allocation14], 0
    %38 = vsyncpa [#allocation17], 0
    %39 = vsyncpa [#allocation20], 0
    %40 = vsyncpa [#allocation23], 0
    %41 = vsyncpa [#allocation26], 0
    loop: start=0, step=1, limit=18
    $region2: #{tpu_custom_call.1} parent=1 // loop_pre_header
      _
    $region3: #{tpu_custom_call.1} parent=1 // loop_header
      %s43 = sphi 0, %s47
      %p44 = scmp.ge.s32.totalorder %s43, 18
      %s50 = sphi 0, %s62
      %s51 = sphi 0, %s58
      %s52 = sphi 0, %s50
      %s53 = sphi 0, %s51
      %s54 = sphi 0, %s52
      %s55 = sphi 0, %s53
      %s67 = sphi 0, %s69
      %s70 = sphi 0, %s67
      %s71 = sphi 0, %s70
      %s87 = sphi 0, %s71
      %s93 = sphi 0, %s95
      %s96 = sphi 0, %s93
      %s97 = sphi 0, %s96
      %s113 = sphi 0, %s97
      %s117 = sphi 0, %s117
      %s119 = sphi 0, %s117
      %s120 = sphi 0, %s119
      %s134 = sphi 0, %s120
      %s138 = sphi 0, %s138
      %s140 = sphi 0, %s138
      %s141 = sphi 0, %s140
      %s155 = sphi 0, %s141
      %s159 = sphi 0, %s159
      %s161 = sphi 0, %s159
      %s162 = sphi 0, %s161
      %s176 = sphi 0, %s162
      %s180 = sphi 0, %s180
      %s182 = sphi 0, %s180
      %s183 = sphi 0, %s182
      %s197 = sphi 0, %s183
      %s201 = sphi 0, %s201
      %s203 = sphi 0, %s201
      %s204 = sphi 0, %s203
      %s218 = sphi 0, %s204
      %s222 = sphi 0, %s222
      %s224 = sphi 0, %s222
      %s225 = sphi 0, %s224
      %s239 = sphi 0, %s225
      %s243 = sphi 0, %s243
      %s245 = sphi 0, %s243
      %s246 = sphi 0, %s245
      %s260 = sphi 0, %s246
      %s264 = sphi 0, %s264
      %s266 = sphi 0, %s264
      %s267 = sphi 0, %s266
      %s281 = sphi 0, %s267
      %s285 = sphi 0, %s285
      %s287 = sphi 0, %s285
      %s288 = sphi 0, %s287
      %s302 = sphi 0, %s288
      %s306 = sphi 0, %s306
      %s308 = sphi 0, %s306
      %s309 = sphi 0, %s308
      %s323 = sphi 0, %s309
      %s327 = sphi 0, %s327
      %s329 = sphi 0, %s327
      %s330 = sphi 0, %s329
      %s344 = sphi 0, %s330
      %s348 = sphi 0, %s348
      %s350 = sphi 0, %s348
      %s351 = sphi 0, %s350
      %s365 = sphi 0, %s351
      %s369 = sphi 0, %s369
      %s371 = sphi 0, %s369
      %s372 = sphi 0, %s371
      %s386 = sphi 0, %s372
      %s390 = sphi 0, %s390
      %s392 = sphi 0, %s390
      %s393 = sphi 0, %s392
      %s407 = sphi 0, %s393
      %s411 = sphi 0, %s411
      %s413 = sphi 0, %s411
      %s414 = sphi 0, %s413
      %s428 = sphi 0, %s414
      %s432 = sphi 0, %s432
      %s434 = sphi 0, %s432
      %s435 = sphi 0, %s434
      %s449 = sphi 0, %s435
      %s453 = sphi 0, %s453
      %s455 = sphi 0, %s453
      %s456 = sphi 0, %s455
      %s470 = sphi 0, %s456
      %s474 = sphi 0, %s474
      %s476 = sphi 0, %s474
      %s477 = sphi 0, %s476
      %s491 = sphi 0, %s477
      %s495 = sphi 0, %s495
      %s497 = sphi 0, %s495
      %s498 = sphi 0, %s497
      %s512 = sphi 0, %s498
      %s516 = sphi 0, %s516
      %s518 = sphi 0, %s516
      %s519 = sphi 0, %s518
      %s533 = sphi 0, %s519
      %s537 = sphi 0, %s537
      %s539 = sphi 0, %s537
      %s540 = sphi 0, %s539
      %s554 = sphi 0, %s540
      %s558 = sphi 0, %s558
      %s560 = sphi 0, %s558
      %s561 = sphi 0, %s560
      %s575 = sphi 0, %s561
      %s579 = sphi 0, %s579
      %s581 = sphi 0, %s579
      %s582 = sphi 0, %s581
      %s596 = sphi 0, %s582
      %s600 = sphi 0, %s600
      %s602 = sphi 0, %s600
      %s603 = sphi 0, %s602
      %s617 = sphi 0, %s603
      %s625 = sphi 0, %s627
      %s628 = sphi 0, %s625
      %s629 = sphi 0, %s628
      %s645 = sphi 0, %s629
    $region4: #{tpu_custom_call.1} parent=1 // loop_header_branch
      %46 = sbr.rel (%p44) target = $region8
    $region5: #{tpu_custom_call.1} parent=1 // loop_body
      %s48 = ssub.s32 %s43, 1
      %s49 = ssub.s32 %s43, 2
      %s56 = sadd.s32 1, %s51
      %p57 = scmp.ge.s32.totalorder %s56, 16
      %s58 = scalar_select %p57, 0, %s56
      %s59 = sadd.s32 1, %s50
      %s60 = scalar_select %p57, %s59, %s50
      %p61 = scmp.ge.s32.totalorder %s60, 1
      %s62 = scalar_select %p61, 0, %s60
      %s63 = ssub.s32 %s51, %s58
      %s64 = ssub.s32 %s50, %s62
      %s65 = sor.u32 %s63, %s64
      %p66 = scmp.eq.s32.totalorder %s65, 0
      %s68 = sadd.s32 %s67, 1
      %s69 = scalar_select %p66, %s67, %s68
      %p72 = pneg %p66
      %p73 = scmp.eq.s32.totalorder %s43, 15
      %p74 = por %p72, %p73
      %p75 = scmp.ne.s32.totalorder %s67, %s70
      %p76 = scmp.eq.s32.totalorder %s43, 0
      %p77 = por %p75, %p76
      %p78 = scmp.ne.s32.totalorder %s67, %s70
      %p79 = scmp.eq.s32.totalorder %s48, 15
      %p80 = por %p78, %p79
      %p81 = scmp.ne.s32.totalorder %s70, %s71
      %p82 = scmp.eq.s32.totalorder %s48, 0
      %p83 = por %p81, %p82
      %p84 = scmp.ne.s32.totalorder %s70, %s71
      %p85 = scmp.eq.s32.totalorder %s49, 15
      %p86 = por %p84, %p85
      %p88 = scmp.ne.s32.totalorder %s71, %s87
      %p89 = scmp.eq.s32.totalorder %s49, 0
      %p90 = por %p88, %p89
      %s91 = ssub.s32 %s50, %s62
      %p92 = scmp.eq.s32.totalorder %s91, 0
      %s94 = sadd.s32 %s93, 1
      %s95 = scalar_select %p92, %s93, %s94
      %p98 = pneg %p92
      %p99 = scmp.eq.s32.totalorder %s43, 15
      %p100 = por %p98, %p99
      %p101 = scmp.ne.s32.totalorder %s93, %s96
      %p102 = scmp.eq.s32.totalorder %s43, 0
      %p103 = por %p101, %p102
      %p104 = scmp.ne.s32.totalorder %s93, %s96
      %p105 = scmp.eq.s32.totalorder %s48, 15
      %p106 = por %p104, %p105
      %p107 = scmp.ne.s32.totalorder %s96, %s97
      %p108 = scmp.eq.s32.totalorder %s48, 0
      %p109 = por %p107, %p108
      %p110 = scmp.ne.s32.totalorder %s96, %s97
      %p111 = scmp.eq.s32.totalorder %s49, 15
      %p112 = por %p110, %p111
      %p114 = scmp.ne.s32.totalorder %s97, %s113
      %p115 = scmp.eq.s32.totalorder %s49, 0
      %p116 = por %p114, %p115
      %s118 = sadd.s32 %s117, 1
      %p121 = scmp.eq.s32.totalorder %s43, 15
      %p122 = scmp.ne.s32.totalorder %s117, %s119
      %p123 = scmp.eq.s32.totalorder %s43, 0
      %p124 = por %p122, %p123
      %p125 = scmp.ne.s32.totalorder %s117, %s119
      %p126 = scmp.eq.s32.totalorder %s48, 15
      %p127 = por %p125, %p126
      %p128 = scmp.ne.s32.totalorder %s119, %s120
      %p129 = scmp.eq.s32.totalorder %s48, 0
      %p130 = por %p128, %p129
      %p131 = scmp.ne.s32.totalorder %s119, %s120
      %p132 = scmp.eq.s32.totalorder %s49, 15
      %p133 = por %p131, %p132
      %p135 = scmp.ne.s32.totalorder %s120, %s134
      %p136 = scmp.eq.s32.totalorder %s49, 0
      %p137 = por %p135, %p136
      %s139 = sadd.s32 %s138, 1
      %p142 = scmp.eq.s32.totalorder %s43, 15
      %p143 = scmp.ne.s32.totalorder %s138, %s140
      %p144 = scmp.eq.s32.totalorder %s43, 0
      %p145 = por %p143, %p144
      %p146 = scmp.ne.s32.totalorder %s138, %s140
      %p147 = scmp.eq.s32.totalorder %s48, 15
      %p148 = por %p146, %p147
      %p149 = scmp.ne.s32.totalorder %s140, %s141
      %p150 = scmp.eq.s32.totalorder %s48, 0
      %p151 = por %p149, %p150
      %p152 = scmp.ne.s32.totalorder %s140, %s141
      %p153 = scmp.eq.s32.totalorder %s49, 15
      %p154 = por %p152, %p153
      %p156 = scmp.ne.s32.totalorder %s141, %s155
      %p157 = scmp.eq.s32.totalorder %s49, 0
      %p158 = por %p156, %p157
      %s160 = sadd.s32 %s159, 1
      %p163 = scmp.eq.s32.totalorder %s43, 15
      %p164 = scmp.ne.s32.totalorder %s159, %s161
      %p165 = scmp.eq.s32.totalorder %s43, 0
      %p166 = por %p164, %p165
      %p167 = scmp.ne.s32.totalorder %s159, %s161
      %p168 = scmp.eq.s32.totalorder %s48, 15
      %p169 = por %p167, %p168
      %p170 = scmp.ne.s32.totalorder %s161, %s162
      %p171 = scmp.eq.s32.totalorder %s48, 0
      %p172 = por %p170, %p171
      %p173 = scmp.ne.s32.totalorder %s161, %s162
      %p174 = scmp.eq.s32.totalorder %s49, 15
      %p175 = por %p173, %p174
      %p177 = scmp.ne.s32.totalorder %s162, %s176
      %p178 = scmp.eq.s32.totalorder %s49, 0
      %p179 = por %p177, %p178
      %s181 = sadd.s32 %s180, 1
      %p184 = scmp.eq.s32.totalorder %s43, 15
      %p185 = scmp.ne.s32.totalorder %s180, %s182
      %p186 = scmp.eq.s32.totalorder %s43, 0
      %p187 = por %p185, %p186
      %p188 = scmp.ne.s32.totalorder %s180, %s182
      %p189 = scmp.eq.s32.totalorder %s48, 15
      %p190 = por %p188, %p189
      %p191 = scmp.ne.s32.totalorder %s182, %s183
      %p192 = scmp.eq.s32.totalorder %s48, 0
      %p193 = por %p191, %p192
      %p194 = scmp.ne.s32.totalorder %s182, %s183
      %p195 = scmp.eq.s32.totalorder %s49, 15
      %p196 = por %p194, %p195
      %p198 = scmp.ne.s32.totalorder %s183, %s197
      %p199 = scmp.eq.s32.totalorder %s49, 0
      %p200 = por %p198, %p199
      %s202 = sadd.s32 %s201, 1
      %p205 = scmp.eq.s32.totalorder %s43, 15
      %p206 = scmp.ne.s32.totalorder %s201, %s203
      %p207 = scmp.eq.s32.totalorder %s43, 0
      %p208 = por %p206, %p207
      %p209 = scmp.ne.s32.totalorder %s201, %s203
      %p210 = scmp.eq.s32.totalorder %s48, 15
      %p211 = por %p209, %p210
      %p212 = scmp.ne.s32.totalorder %s203, %s204
      %p213 = scmp.eq.s32.totalorder %s48, 0
      %p214 = por %p212, %p213
      %p215 = scmp.ne.s32.totalorder %s203, %s204
      %p216 = scmp.eq.s32.totalorder %s49, 15
      %p217 = por %p215, %p216
      %p219 = scmp.ne.s32.totalorder %s204, %s218
      %p220 = scmp.eq.s32.totalorder %s49, 0
      %p221 = por %p219, %p220
      %s223 = sadd.s32 %s222, 1
      %p226 = scmp.eq.s32.totalorder %s43, 15
      %p227 = scmp.ne.s32.totalorder %s222, %s224
      %p228 = scmp.eq.s32.totalorder %s43, 0
      %p229 = por %p227, %p228
      %p230 = scmp.ne.s32.totalorder %s222, %s224
      %p231 = scmp.eq.s32.totalorder %s48, 15
      %p232 = por %p230, %p231
      %p233 = scmp.ne.s32.totalorder %s224, %s225
      %p234 = scmp.eq.s32.totalorder %s48, 0
      %p235 = por %p233, %p234
      %p236 = scmp.ne.s32.totalorder %s224, %s225
      %p237 = scmp.eq.s32.totalorder %s49, 15
      %p238 = por %p236, %p237
      %p240 = scmp.ne.s32.totalorder %s225, %s239
      %p241 = scmp.eq.s32.totalorder %s49, 0
      %p242 = por %p240, %p241
      %s244 = sadd.s32 %s243, 1
      %p247 = scmp.eq.s32.totalorder %s43, 15
      %p248 = scmp.ne.s32.totalorder %s243, %s245
      %p249 = scmp.eq.s32.totalorder %s43, 0
      %p250 = por %p248, %p249
      %p251 = scmp.ne.s32.totalorder %s243, %s245
      %p252 = scmp.eq.s32.totalorder %s48, 15
      %p253 = por %p251, %p252
      %p254 = scmp.ne.s32.totalorder %s245, %s246
      %p255 = scmp.eq.s32.totalorder %s48, 0
      %p256 = por %p254, %p255
      %p257 = scmp.ne.s32.totalorder %s245, %s246
      %p258 = scmp.eq.s32.totalorder %s49, 15
      %p259 = por %p257, %p258
      %p261 = scmp.ne.s32.totalorder %s246, %s260
      %p262 = scmp.eq.s32.totalorder %s49, 0
      %p263 = por %p261, %p262
      %s265 = sadd.s32 %s264, 1
      %p268 = scmp.eq.s32.totalorder %s43, 15
      %p269 = scmp.ne.s32.totalorder %s264, %s266
      %p270 = scmp.eq.s32.totalorder %s43, 0
      %p271 = por %p269, %p270
      %p272 = scmp.ne.s32.totalorder %s264, %s266
      %p273 = scmp.eq.s32.totalorder %s48, 15
      %p274 = por %p272, %p273
      %p275 = scmp.ne.s32.totalorder %s266, %s267
      %p276 = scmp.eq.s32.totalorder %s48, 0
      %p277 = por %p275, %p276
      %p278 = scmp.ne.s32.totalorder %s266, %s267
      %p279 = scmp.eq.s32.totalorder %s49, 15
      %p280 = por %p278, %p279
      %p282 = scmp.ne.s32.totalorder %s267, %s281
      %p283 = scmp.eq.s32.totalorder %s49, 0
      %p284 = por %p282, %p283
      %s286 = sadd.s32 %s285, 1
      %p289 = scmp.eq.s32.totalorder %s43, 15
      %p290 = scmp.ne.s32.totalorder %s285, %s287
      %p291 = scmp.eq.s32.totalorder %s43, 0
      %p292 = por %p290, %p291
      %p293 = scmp.ne.s32.totalorder %s285, %s287
      %p294 = scmp.eq.s32.totalorder %s48, 15
      %p295 = por %p293, %p294
      %p296 = scmp.ne.s32.totalorder %s287, %s288
      %p297 = scmp.eq.s32.totalorder %s48, 0
      %p298 = por %p296, %p297
      %p299 = scmp.ne.s32.totalorder %s287, %s288
      %p300 = scmp.eq.s32.totalorder %s49, 15
      %p301 = por %p299, %p300
      %p303 = scmp.ne.s32.totalorder %s288, %s302
      %p304 = scmp.eq.s32.totalorder %s49, 0
      %p305 = por %p303, %p304
      %s307 = sadd.s32 %s306, 1
      %p310 = scmp.eq.s32.totalorder %s43, 15
      %p311 = scmp.ne.s32.totalorder %s306, %s308
      %p312 = scmp.eq.s32.totalorder %s43, 0
      %p313 = por %p311, %p312
      %p314 = scmp.ne.s32.totalorder %s306, %s308
      %p315 = scmp.eq.s32.totalorder %s48, 15
      %p316 = por %p314, %p315
      %p317 = scmp.ne.s32.totalorder %s308, %s309
      %p318 = scmp.eq.s32.totalorder %s48, 0
      %p319 = por %p317, %p318
      %p320 = scmp.ne.s32.totalorder %s308, %s309
      %p321 = scmp.eq.s32.totalorder %s49, 15
      %p322 = por %p320, %p321
      %p324 = scmp.ne.s32.totalorder %s309, %s323
      %p325 = scmp.eq.s32.totalorder %s49, 0
      %p326 = por %p324, %p325
      %s328 = sadd.s32 %s327, 1
      %p331 = scmp.eq.s32.totalorder %s43, 15
      %p332 = scmp.ne.s32.totalorder %s327, %s329
      %p333 = scmp.eq.s32.totalorder %s43, 0
      %p334 = por %p332, %p333
      %p335 = scmp.ne.s32.totalorder %s327, %s329
      %p336 = scmp.eq.s32.totalorder %s48, 15
      %p337 = por %p335, %p336
      %p338 = scmp.ne.s32.totalorder %s329, %s330
      %p339 = scmp.eq.s32.totalorder %s48, 0
      %p340 = por %p338, %p339
      %p341 = scmp.ne.s32.totalorder %s329, %s330
      %p342 = scmp.eq.s32.totalorder %s49, 15
      %p343 = por %p341, %p342
      %p345 = scmp.ne.s32.totalorder %s330, %s344
      %p346 = scmp.eq.s32.totalorder %s49, 0
      %p347 = por %p345, %p346
      %s349 = sadd.s32 %s348, 1
      %p352 = scmp.eq.s32.totalorder %s43, 15
      %p353 = scmp.ne.s32.totalorder %s348, %s350
      %p354 = scmp.eq.s32.totalorder %s43, 0
      %p355 = por %p353, %p354
      %p356 = scmp.ne.s32.totalorder %s348, %s350
      %p357 = scmp.eq.s32.totalorder %s48, 15
      %p358 = por %p356, %p357
      %p359 = scmp.ne.s32.totalorder %s350, %s351
      %p360 = scmp.eq.s32.totalorder %s48, 0
      %p361 = por %p359, %p360
      %p362 = scmp.ne.s32.totalorder %s350, %s351
      %p363 = scmp.eq.s32.totalorder %s49, 15
      %p364 = por %p362, %p363
      %p366 = scmp.ne.s32.totalorder %s351, %s365
      %p367 = scmp.eq.s32.totalorder %s49, 0
      %p368 = por %p366, %p367
      %s370 = sadd.s32 %s369, 1
      %p373 = scmp.eq.s32.totalorder %s43, 15
      %p374 = scmp.ne.s32.totalorder %s369, %s371
      %p375 = scmp.eq.s32.totalorder %s43, 0
      %p376 = por %p374, %p375
      %p377 = scmp.ne.s32.totalorder %s369, %s371
      %p378 = scmp.eq.s32.totalorder %s48, 15
      %p379 = por %p377, %p378
      %p380 = scmp.ne.s32.totalorder %s371, %s372
      %p381 = scmp.eq.s32.totalorder %s48, 0
      %p382 = por %p380, %p381
      %p383 = scmp.ne.s32.totalorder %s371, %s372
      %p384 = scmp.eq.s32.totalorder %s49, 15
      %p385 = por %p383, %p384
      %p387 = scmp.ne.s32.totalorder %s372, %s386
      %p388 = scmp.eq.s32.totalorder %s49, 0
      %p389 = por %p387, %p388
      %s391 = sadd.s32 %s390, 1
      %p394 = scmp.eq.s32.totalorder %s43, 15
      %p395 = scmp.ne.s32.totalorder %s390, %s392
      %p396 = scmp.eq.s32.totalorder %s43, 0
      %p397 = por %p395, %p396
      %p398 = scmp.ne.s32.totalorder %s390, %s392
      %p399 = scmp.eq.s32.totalorder %s48, 15
      %p400 = por %p398, %p399
      %p401 = scmp.ne.s32.totalorder %s392, %s393
      %p402 = scmp.eq.s32.totalorder %s48, 0
      %p403 = por %p401, %p402
      %p404 = scmp.ne.s32.totalorder %s392, %s393
      %p405 = scmp.eq.s32.totalorder %s49, 15
      %p406 = por %p404, %p405
      %p408 = scmp.ne.s32.totalorder %s393, %s407
      %p409 = scmp.eq.s32.totalorder %s49, 0
      %p410 = por %p408, %p409
      %s412 = sadd.s32 %s411, 1
      %p415 = scmp.eq.s32.totalorder %s43, 15
      %p416 = scmp.ne.s32.totalorder %s411, %s413
      %p417 = scmp.eq.s32.totalorder %s43, 0
      %p418 = por %p416, %p417
      %p419 = scmp.ne.s32.totalorder %s411, %s413
      %p420 = scmp.eq.s32.totalorder %s48, 15
      %p421 = por %p419, %p420
      %p422 = scmp.ne.s32.totalorder %s413, %s414
      %p423 = scmp.eq.s32.totalorder %s48, 0
      %p424 = por %p422, %p423
      %p425 = scmp.ne.s32.totalorder %s413, %s414
      %p426 = scmp.eq.s32.totalorder %s49, 15
      %p427 = por %p425, %p426
      %p429 = scmp.ne.s32.totalorder %s414, %s428
      %p430 = scmp.eq.s32.totalorder %s49, 0
      %p431 = por %p429, %p430
      %s433 = sadd.s32 %s432, 1
      %p436 = scmp.eq.s32.totalorder %s43, 15
      %p437 = scmp.ne.s32.totalorder %s432, %s434
      %p438 = scmp.eq.s32.totalorder %s43, 0
      %p439 = por %p437, %p438
      %p440 = scmp.ne.s32.totalorder %s432, %s434
      %p441 = scmp.eq.s32.totalorder %s48, 15
      %p442 = por %p440, %p441
      %p443 = scmp.ne.s32.totalorder %s434, %s435
      %p444 = scmp.eq.s32.totalorder %s48, 0
      %p445 = por %p443, %p444
      %p446 = scmp.ne.s32.totalorder %s434, %s435
      %p447 = scmp.eq.s32.totalorder %s49, 15
      %p448 = por %p446, %p447
      %p450 = scmp.ne.s32.totalorder %s435, %s449
      %p451 = scmp.eq.s32.totalorder %s49, 0
      %p452 = por %p450, %p451
      %s454 = sadd.s32 %s453, 1
      %p457 = scmp.eq.s32.totalorder %s43, 15
      %p458 = scmp.ne.s32.totalorder %s453, %s455
      %p459 = scmp.eq.s32.totalorder %s43, 0
      %p460 = por %p458, %p459
      %p461 = scmp.ne.s32.totalorder %s453, %s455
      %p462 = scmp.eq.s32.totalorder %s48, 15
      %p463 = por %p461, %p462
      %p464 = scmp.ne.s32.totalorder %s455, %s456
      %p465 = scmp.eq.s32.totalorder %s48, 0
      %p466 = por %p464, %p465
      %p467 = scmp.ne.s32.totalorder %s455, %s456
      %p468 = scmp.eq.s32.totalorder %s49, 15
      %p469 = por %p467, %p468
      %p471 = scmp.ne.s32.totalorder %s456, %s470
      %p472 = scmp.eq.s32.totalorder %s49, 0
      %p473 = por %p471, %p472
      %s475 = sadd.s32 %s474, 1
      %p478 = scmp.eq.s32.totalorder %s43, 15
      %p479 = scmp.ne.s32.totalorder %s474, %s476
      %p480 = scmp.eq.s32.totalorder %s43, 0
      %p481 = por %p479, %p480
      %p482 = scmp.ne.s32.totalorder %s474, %s476
      %p483 = scmp.eq.s32.totalorder %s48, 15
      %p484 = por %p482, %p483
      %p485 = scmp.ne.s32.totalorder %s476, %s477
      %p486 = scmp.eq.s32.totalorder %s48, 0
      %p487 = por %p485, %p486
      %p488 = scmp.ne.s32.totalorder %s476, %s477
      %p489 = scmp.eq.s32.totalorder %s49, 15
      %p490 = por %p488, %p489
      %p492 = scmp.ne.s32.totalorder %s477, %s491
      %p493 = scmp.eq.s32.totalorder %s49, 0
      %p494 = por %p492, %p493
      %s496 = sadd.s32 %s495, 1
      %p499 = scmp.eq.s32.totalorder %s43, 15
      %p500 = scmp.ne.s32.totalorder %s495, %s497
      %p501 = scmp.eq.s32.totalorder %s43, 0
      %p502 = por %p500, %p501
      %p503 = scmp.ne.s32.totalorder %s495, %s497
      %p504 = scmp.eq.s32.totalorder %s48, 15
      %p505 = por %p503, %p504
      %p506 = scmp.ne.s32.totalorder %s497, %s498
      %p507 = scmp.eq.s32.totalorder %s48, 0
      %p508 = por %p506, %p507
      %p509 = scmp.ne.s32.totalorder %s497, %s498
      %p510 = scmp.eq.s32.totalorder %s49, 15
      %p511 = por %p509, %p510
      %p513 = scmp.ne.s32.totalorder %s498, %s512
      %p514 = scmp.eq.s32.totalorder %s49, 0
      %p515 = por %p513, %p514
      %s517 = sadd.s32 %s516, 1
      %p520 = scmp.eq.s32.totalorder %s43, 15
      %p521 = scmp.ne.s32.totalorder %s516, %s518
      %p522 = scmp.eq.s32.totalorder %s43, 0
      %p523 = por %p521, %p522
      %p524 = scmp.ne.s32.totalorder %s516, %s518
      %p525 = scmp.eq.s32.totalorder %s48, 15
      %p526 = por %p524, %p525
      %p527 = scmp.ne.s32.totalorder %s518, %s519
      %p528 = scmp.eq.s32.totalorder %s48, 0
      %p529 = por %p527, %p528
      %p530 = scmp.ne.s32.totalorder %s518, %s519
      %p531 = scmp.eq.s32.totalorder %s49, 15
      %p532 = por %p530, %p531
      %p534 = scmp.ne.s32.totalorder %s519, %s533
      %p535 = scmp.eq.s32.totalorder %s49, 0
      %p536 = por %p534, %p535
      %s538 = sadd.s32 %s537, 1
      %p541 = scmp.eq.s32.totalorder %s43, 15
      %p542 = scmp.ne.s32.totalorder %s537, %s539
      %p543 = scmp.eq.s32.totalorder %s43, 0
      %p544 = por %p542, %p543
      %p545 = scmp.ne.s32.totalorder %s537, %s539
      %p546 = scmp.eq.s32.totalorder %s48, 15
      %p547 = por %p545, %p546
      %p548 = scmp.ne.s32.totalorder %s539, %s540
      %p549 = scmp.eq.s32.totalorder %s48, 0
      %p550 = por %p548, %p549
      %p551 = scmp.ne.s32.totalorder %s539, %s540
      %p552 = scmp.eq.s32.totalorder %s49, 15
      %p553 = por %p551, %p552
      %p555 = scmp.ne.s32.totalorder %s540, %s554
      %p556 = scmp.eq.s32.totalorder %s49, 0
      %p557 = por %p555, %p556
      %s559 = sadd.s32 %s558, 1
      %p562 = scmp.eq.s32.totalorder %s43, 15
      %p563 = scmp.ne.s32.totalorder %s558, %s560
      %p564 = scmp.eq.s32.totalorder %s43, 0
      %p565 = por %p563, %p564
      %p566 = scmp.ne.s32.totalorder %s558, %s560
      %p567 = scmp.eq.s32.totalorder %s48, 15
      %p568 = por %p566, %p567
      %p569 = scmp.ne.s32.totalorder %s560, %s561
      %p570 = scmp.eq.s32.totalorder %s48, 0
      %p571 = por %p569, %p570
      %p572 = scmp.ne.s32.totalorder %s560, %s561
      %p573 = scmp.eq.s32.totalorder %s49, 15
      %p574 = por %p572, %p573
      %p576 = scmp.ne.s32.totalorder %s561, %s575
      %p577 = scmp.eq.s32.totalorder %s49, 0
      %p578 = por %p576, %p577
      %s580 = sadd.s32 %s579, 1
      %p583 = scmp.eq.s32.totalorder %s43, 15
      %p584 = scmp.ne.s32.totalorder %s579, %s581
      %p585 = scmp.eq.s32.totalorder %s43, 0
      %p586 = por %p584, %p585
      %p587 = scmp.ne.s32.totalorder %s579, %s581
      %p588 = scmp.eq.s32.totalorder %s48, 15
      %p589 = por %p587, %p588
      %p590 = scmp.ne.s32.totalorder %s581, %s582
      %p591 = scmp.eq.s32.totalorder %s48, 0
      %p592 = por %p590, %p591
      %p593 = scmp.ne.s32.totalorder %s581, %s582
      %p594 = scmp.eq.s32.totalorder %s49, 15
      %p595 = por %p593, %p594
      %p597 = scmp.ne.s32.totalorder %s582, %s596
      %p598 = scmp.eq.s32.totalorder %s49, 0
      %p599 = por %p597, %p598
      %s601 = sadd.s32 %s600, 1
      %p604 = scmp.eq.s32.totalorder %s43, 15
      %p605 = scmp.ne.s32.totalorder %s600, %s602
      %p606 = scmp.eq.s32.totalorder %s43, 0
      %p607 = por %p605, %p606
      %p608 = scmp.ne.s32.totalorder %s600, %s602
      %p609 = scmp.eq.s32.totalorder %s48, 15
      %p610 = por %p608, %p609
      %p611 = scmp.ne.s32.totalorder %s602, %s603
      %p612 = scmp.eq.s32.totalorder %s48, 0
      %p613 = por %p611, %p612
      %p614 = scmp.ne.s32.totalorder %s602, %s603
      %p615 = scmp.eq.s32.totalorder %s49, 15
      %p616 = por %p614, %p615
      %p618 = scmp.ne.s32.totalorder %s603, %s617
      %p619 = scmp.eq.s32.totalorder %s49, 0
      %p620 = por %p618, %p619
      %s621 = ssub.s32 %s51, %s58
      %s622 = ssub.s32 %s50, %s62
      %s623 = sor.u32 %s621, %s622
      %p624 = scmp.eq.s32.totalorder %s623, 0
      %s626 = sadd.s32 %s625, 1
      %s627 = scalar_select %p624, %s625, %s626
      %p630 = pneg %p624
      %p631 = scmp.eq.s32.totalorder %s43, 15
      %p632 = por %p630, %p631
      %p633 = scmp.ne.s32.totalorder %s625, %s628
      %p634 = scmp.eq.s32.totalorder %s43, 0
      %p635 = por %p633, %p634
      %p636 = scmp.ne.s32.totalorder %s625, %s628
      %p637 = scmp.eq.s32.totalorder %s48, 15
      %p638 = por %p636, %p637
      %p639 = scmp.ne.s32.totalorder %s628, %s629
      %p640 = scmp.eq.s32.totalorder %s48, 0
      %p641 = por %p639, %p640
      %p642 = scmp.ne.s32.totalorder %s628, %s629
      %p643 = scmp.eq.s32.totalorder %s49, 15
      %p644 = por %p642, %p643
      %p646 = scmp.ne.s32.totalorder %s629, %s645
      %p647 = scmp.eq.s32.totalorder %s49, 0
      %p648 = por %p646, %p647
      %p649 = scmp.le.s32.totalorder 1, %s43
      %p650 = scmp.lt.s32.totalorder %s43, 17
      %p651 = pnand %p649, %p650
      %p652 = pneg %p651
      // Predicated region
      $region9: #{tpu_custom_call.1} parent=5 // pred_check
        _
      $region10: #{tpu_custom_call.1} parent=5 // pred_check_branch
        %654 = sbr.rel (%p651) target = $region12
      $region11: #{tpu_custom_call.1} parent=5 // pred_region
        %s655 = ssub.s32 %s43, 1
        // Predicated region
        $region13: #{tpu_custom_call.1} parent=11 // pred_check
          %p656 = pneg %p109
        $region14: #{tpu_custom_call.1} parent=11 // pred_check_branch
          %658 = sbr.rel (%p656) target = $region16
        $region15: #{tpu_custom_call.1} parent=11 // pred_region
          %p659 = scmp.lt.s32.totalorder %s52, 0
          %s660 = scalar_select %p659, %s52, 0
          %s661 = smul.addr %s660, 8
          %s662 = scalar_lea.vmem %s1, %s661
        $region16: #{tpu_custom_call.1} parent=11 // pred_fallthru
          _
        // Predicated region
        $region17: #{tpu_custom_call.1} parent=11 // pred_check
          %p663 = pneg %p130
        $region18: #{tpu_custom_call.1} parent=11 // pred_check_branch
          %665 = sbr.rel (%p663) target = $region20
        $region19: #{tpu_custom_call.1} parent=11 // pred_region
          %667 = vsyncadd [#allocation5], 0
          %s668 = sshll.u32 %s2, 4
          %s669 = int_to_ptr.hbm [resolvable:$true] %s668
          %s670 = sshll.u32 [#allocation4], 4
          %s671 = int_to_ptr.vmem [resolvable:$true] %s670
          %676 = dma.hbm_to_vmem [thread:$0]  %s669, 192, %s671, [#allocation5], 64, 64, 4
        $region20: #{tpu_custom_call.1} parent=11 // pred_fallthru
          _
        // Predicated region
        $region21: #{tpu_custom_call.1} parent=11 // pred_check
          %p677 = pneg %p151
        $region22: #{tpu_custom_call.1} parent=11 // pred_check_branch
          %679 = sbr.rel (%p677) target = $region24
        $region23: #{tpu_custom_call.1} parent=11 // pred_region
          _
        $region24: #{tpu_custom_call.1} parent=11 // pred_fallthru
          _
        // Predicated region
        $region25: #{tpu_custom_call.1} parent=11 // pred_check
          %p680 = pneg %p172
        $region26: #{tpu_custom_call.1} parent=11 // pred_check_branch
          %682 = sbr.rel (%p680) target = $region28
        $region27: #{tpu_custom_call.1} parent=11 // pred_region
          _
        $region28: #{tpu_custom_call.1} parent=11 // pred_fallthru
          _
        // Predicated region
        $region29: #{tpu_custom_call.1} parent=11 // pred_check
          %p683 = pneg %p193
        $region30: #{tpu_custom_call.1} parent=11 // pred_check_branch
          %685 = sbr.rel (%p683) target = $region32
        $region31: #{tpu_custom_call.1} parent=11 // pred_region
          _
        $region32: #{tpu_custom_call.1} parent=11 // pred_fallthru
          _
        // Predicated region
        $region33: #{tpu_custom_call.1} parent=11 // pred_check
          %p686 = pneg %p214
        $region34: #{tpu_custom_call.1} parent=11 // pred_check_branch
          %688 = sbr.rel (%p686) target = $region36
        $region35: #{tpu_custom_call.1} parent=11 // pred_region
          %690 = vsyncadd [#allocation5], 0
          %s691 = sshll.u32 %s6, 4
          %s692 = int_to_ptr.hbm [resolvable:$true] %s691
          %s693 = sshll.u32 [#allocation6], 4
          %s694 = int_to_ptr.vmem [resolvable:$true] %s693
          %699 = dma.hbm_to_vmem [thread:$0]  %s692, 256, %s694, [#allocation5], 64, 64, 4
        $region36: #{tpu_custom_call.1} parent=11 // pred_fallthru
          _
        // Predicated region
        $region37: #{tpu_custom_call.1} parent=11 // pred_check
          %p700 = pneg %p235
        $region38: #{tpu_custom_call.1} parent=11 // pred_check_branch
          %702 = sbr.rel (%p700) target = $region40
        $region39: #{tpu_custom_call.1} parent=11 // pred_region
          %704 = vsyncadd [#allocation8], 0
          %s706 = sshll.u32 %s7, 4
          %s707 = int_to_ptr.hbm [resolvable:$true] %s706
          %s708 = sshll.u32 [#allocation7], 4
          %s709 = int_to_ptr.vmem [resolvable:$true] %s708
          %711 = dma.hbm_to_vmem [thread:$0]  %s707, 16, %s709, [#allocation8]
        $region40: #{tpu_custom_call.1} parent=11 // pred_fallthru
          _
        // Predicated region
        $region41: #{tpu_custom_call.1} parent=11 // pred_check
          %p712 = pneg %p256
        $region42: #{tpu_custom_call.1} parent=11 // pred_check_branch
          %714 = sbr.rel (%p712) target = $region44
        $region43: #{tpu_custom_call.1} parent=11 // pred_region
          %716 = vsyncadd [#allocation8], 0
          %s717 = sshll.u32 %s8, 4
          %s718 = int_to_ptr.hbm [resolvable:$true] %s717
          %s719 = sshll.u32 [#allocation9], 4
          %s720 = int_to_ptr.vmem [resolvable:$true] %s719
          %725 = dma.hbm_to_vmem [thread:$0]  %s718, 256, %s720, [#allocation8], 64, 64, 4
        $region44: #{tpu_custom_call.1} parent=11 // pred_fallthru
          _
        // Predicated region
        $region45: #{tpu_custom_call.1} parent=11 // pred_check
          %p726 = pneg %p277
        $region46: #{tpu_custom_call.1} parent=11 // pred_check_branch
          %728 = sbr.rel (%p726) target = $region48
        $region47: #{tpu_custom_call.1} parent=11 // pred_region
          %730 = vsyncadd [#allocation11], 0
          %s732 = sshll.u32 %s9, 4
          %s733 = int_to_ptr.hbm [resolvable:$true] %s732
          %s734 = sshll.u32 [#allocation10], 4
          %s735 = int_to_ptr.vmem [resolvable:$true] %s734
          %737 = dma.hbm_to_vmem [thread:$0]  %s733, 16, %s735, [#allocation11]
        $region48: #{tpu_custom_call.1} parent=11 // pred_fallthru
          _
        // Predicated region
        $region49: #{tpu_custom_call.1} parent=11 // pred_check
          %p738 = pneg %p298
        $region50: #{tpu_custom_call.1} parent=11 // pred_check_branch
          %740 = sbr.rel (%p738) target = $region52
        $region51: #{tpu_custom_call.1} parent=11 // pred_region
          %742 = vsyncadd [#allocation11], 0
          %s743 = sshll.u32 %s10, 4
          %s744 = int_to_ptr.hbm [resolvable:$true] %s743
          %s745 = sshll.u32 [#allocation12], 4
          %s746 = int_to_ptr.vmem [resolvable:$true] %s745
          %751 = dma.hbm_to_vmem [thread:$0]  %s744, 256, %s746, [#allocation11], 64, 64, 4
        $region52: #{tpu_custom_call.1} parent=11 // pred_fallthru
          _
        // Predicated region
        $region53: #{tpu_custom_call.1} parent=11 // pred_check
          %p752 = pneg %p319
        $region54: #{tpu_custom_call.1} parent=11 // pred_check_branch
          %754 = sbr.rel (%p752) target = $region56
        $region55: #{tpu_custom_call.1} parent=11 // pred_region
          %756 = vsyncadd [#allocation14], 0
          %s757 = sshll.u32 %s11, 4
          %s758 = int_to_ptr.hbm [resolvable:$true] %s757
          %s759 = sshll.u32 [#allocation13], 4
          %s760 = int_to_ptr.vmem [resolvable:$true] %s759
          %765 = dma.hbm_to_vmem [thread:$0]  %s758, 192, %s760, [#allocation14], 64, 64, 4
        $region56: #{tpu_custom_call.1} parent=11 // pred_fallthru
          _
        // Predicated region
        $region57: #{tpu_custom_call.1} parent=11 // pred_check
          %p766 = pneg %p340
        $region58: #{tpu_custom_call.1} parent=11 // pred_check_branch
          %768 = sbr.rel (%p766) target = $region60
        $region59: #{tpu_custom_call.1} parent=11 // pred_region
          %770 = vsyncadd [#allocation14], 0
          %s772 = sshll.u32 %s12, 4
          %s773 = int_to_ptr.hbm [resolvable:$true] %s772
          %s774 = sshll.u32 [#allocation15], 4
          %s775 = int_to_ptr.vmem [resolvable:$true] %s774
          %777 = dma.hbm_to_vmem [thread:$0]  %s773, 16, %s775, [#allocation14]
        $region60: #{tpu_custom_call.1} parent=11 // pred_fallthru
          _
        // Predicated region
        $region61: #{tpu_custom_call.1} parent=11 // pred_check
          %p778 = pneg %p361
        $region62: #{tpu_custom_call.1} parent=11 // pred_check_branch
          %780 = sbr.rel (%p778) target = $region64
        $region63: #{tpu_custom_call.1} parent=11 // pred_region
          %782 = vsyncadd [#allocation17], 0
          %s783 = sshll.u32 %s13, 4
          %s784 = int_to_ptr.hbm [resolvable:$true] %s783
          %s785 = sshll.u32 [#allocation16], 4
          %s786 = int_to_ptr.vmem [resolvable:$true] %s785
          %791 = dma.hbm_to_vmem [thread:$0]  %s784, 256, %s786, [#allocation17], 64, 64, 4
        $region64: #{tpu_custom_call.1} parent=11 // pred_fallthru
          _
        // Predicated region
        $region65: #{tpu_custom_call.1} parent=11 // pred_check
          %p792 = pneg %p382
        $region66: #{tpu_custom_call.1} parent=11 // pred_check_branch
          %794 = sbr.rel (%p792) target = $region68
        $region67: #{tpu_custom_call.1} parent=11 // pred_region
          %796 = vsyncadd [#allocation17], 0
          %s798 = sshll.u32 %s14, 4
          %s799 = int_to_ptr.hbm [resolvable:$true] %s798
          %s800 = sshll.u32 [#allocation18], 4
          %s801 = int_to_ptr.vmem [resolvable:$true] %s800
          %803 = dma.hbm_to_vmem [thread:$0]  %s799, 16, %s801, [#allocation17]
        $region68: #{tpu_custom_call.1} parent=11 // pred_fallthru
          _
        // Predicated region
        $region69: #{tpu_custom_call.1} parent=11 // pred_check
          %p804 = pneg %p403
        $region70: #{tpu_custom_call.1} parent=11 // pred_check_branch
          %806 = sbr.rel (%p804) target = $region72
        $region71: #{tpu_custom_call.1} parent=11 // pred_region
          %808 = vsyncadd [#allocation20], 0
          %s809 = sshll.u32 %s15, 4
          %s810 = int_to_ptr.hbm [resolvable:$true] %s809
          %s811 = sshll.u32 [#allocation19], 4
          %s812 = int_to_ptr.vmem [resolvable:$true] %s811
          %817 = dma.hbm_to_vmem [thread:$0]  %s810, 256, %s812, [#allocation20], 64, 64, 4
        $region72: #{tpu_custom_call.1} parent=11 // pred_fallthru
          _
        // Predicated region
        $region73: #{tpu_custom_call.1} parent=11 // pred_check
          %p818 = pneg %p424
        $region74: #{tpu_custom_call.1} parent=11 // pred_check_branch
          %820 = sbr.rel (%p818) target = $region76
        $region75: #{tpu_custom_call.1} parent=11 // pred_region
          %822 = vsyncadd [#allocation20], 0
          %s824 = sshll.u32 %s16, 4
          %s825 = int_to_ptr.hbm [resolvable:$true] %s824
          %s826 = sshll.u32 [#allocation21], 4
          %s827 = int_to_ptr.vmem [resolvable:$true] %s826
          %829 = dma.hbm_to_vmem [thread:$0]  %s825, 16, %s827, [#allocation20]
        $region76: #{tpu_custom_call.1} parent=11 // pred_fallthru
          _
        // Predicated region
        $region77: #{tpu_custom_call.1} parent=11 // pred_check
          %p830 = pneg %p445
        $region78: #{tpu_custom_call.1} parent=11 // pred_check_branch
          %832 = sbr.rel (%p830) target = $region80
        $region79: #{tpu_custom_call.1} parent=11 // pred_region
          %834 = vsyncadd [#allocation23], 0
          %s835 = sshll.u32 %s17, 4
          %s836 = int_to_ptr.hbm [resolvable:$true] %s835
          %s837 = sshll.u32 [#allocation22], 4
          %s838 = int_to_ptr.vmem [resolvable:$true] %s837
          %843 = dma.hbm_to_vmem [thread:$0]  %s836, 256, %s838, [#allocation23], 64, 64, 4
        $region80: #{tpu_custom_call.1} parent=11 // pred_fallthru
          _
        // Predicated region
        $region81: #{tpu_custom_call.1} parent=11 // pred_check
          %p844 = pneg %p466
        $region82: #{tpu_custom_call.1} parent=11 // pred_check_branch
          %846 = sbr.rel (%p844) target = $region84
        $region83: #{tpu_custom_call.1} parent=11 // pred_region
          %848 = vsyncadd [#allocation23], 0
          %s850 = sshll.u32 %s18, 4
          %s851 = int_to_ptr.hbm [resolvable:$true] %s850
          %s852 = sshll.u32 [#allocation24], 4
          %s853 = int_to_ptr.vmem [resolvable:$true] %s852
          %855 = dma.hbm_to_vmem [thread:$0]  %s851, 16, %s853, [#allocation23]
        $region84: #{tpu_custom_call.1} parent=11 // pred_fallthru
          _
        // Predicated region
        $region85: #{tpu_custom_call.1} parent=11 // pred_check
          %p856 = pneg %p487
        $region86: #{tpu_custom_call.1} parent=11 // pred_check_branch
          %858 = sbr.rel (%p856) target = $region88
        $region87: #{tpu_custom_call.1} parent=11 // pred_region
          _
        $region88: #{tpu_custom_call.1} parent=11 // pred_fallthru
          _
        // Predicated region
        $region89: #{tpu_custom_call.1} parent=11 // pred_check
          %p859 = pneg %p508
        $region90: #{tpu_custom_call.1} parent=11 // pred_check_branch
          %861 = sbr.rel (%p859) target = $region92
        $region91: #{tpu_custom_call.1} parent=11 // pred_region
          _
        $region92: #{tpu_custom_call.1} parent=11 // pred_fallthru
          _
        // Predicated region
        $region93: #{tpu_custom_call.1} parent=11 // pred_check
          %p862 = pneg %p529
        $region94: #{tpu_custom_call.1} parent=11 // pred_check_branch
          %864 = sbr.rel (%p862) target = $region96
        $region95: #{tpu_custom_call.1} parent=11 // pred_region
          _
        $region96: #{tpu_custom_call.1} parent=11 // pred_fallthru
          _
        // Predicated region
        $region97: #{tpu_custom_call.1} parent=11 // pred_check
          %p865 = pneg %p550
        $region98: #{tpu_custom_call.1} parent=11 // pred_check_branch
          %867 = sbr.rel (%p865) target = $region100
        $region99: #{tpu_custom_call.1} parent=11 // pred_region
          %869 = vsyncadd [#allocation26], 0
          %s870 = sshll.u32 %s22, 4
          %s871 = int_to_ptr.hbm [resolvable:$true] %s870
          %s872 = sshll.u32 [#allocation25], 4
          %s873 = int_to_ptr.vmem [resolvable:$true] %s872
          %878 = dma.hbm_to_vmem [thread:$0]  %s871, 128, %s873, [#allocation26], 64, 64, 4
        $region100: #{tpu_custom_call.1} parent=11 // pred_fallthru
          _
        // Predicated region
        $region101: #{tpu_custom_call.1} parent=11 // pred_check
          %p879 = pneg %p571
        $region102: #{tpu_custom_call.1} parent=11 // pred_check_branch
          %881 = sbr.rel (%p879) target = $region104
        $region103: #{tpu_custom_call.1} parent=11 // pred_region
          _
        $region104: #{tpu_custom_call.1} parent=11 // pred_fallthru
          _
        // Predicated region
        $region105: #{tpu_custom_call.1} parent=11 // pred_check
          %p882 = pneg %p592
        $region106: #{tpu_custom_call.1} parent=11 // pred_check_branch
          %884 = sbr.rel (%p882) target = $region108
        $region107: #{tpu_custom_call.1} parent=11 // pred_region
          _
        $region108: #{tpu_custom_call.1} parent=11 // pred_fallthru
          _
        // Predicated region
        $region109: #{tpu_custom_call.1} parent=11 // pred_check
          %p885 = pneg %p613
        $region110: #{tpu_custom_call.1} parent=11 // pred_check_branch
          %887 = sbr.rel (%p885) target = $region112
        $region111: #{tpu_custom_call.1} parent=11 // pred_region
          _
        $region112: #{tpu_custom_call.1} parent=11 // pred_fallthru
          _
      $region12: #{tpu_custom_call.1} parent=5 // pred_fallthru
        _
      %p888 = scmp.lt.s32.totalorder %s43, 16
      // Predicated region
      $region113: #{tpu_custom_call.1} parent=5 // pred_check
        %p889 = pneg %p888
      $region114: #{tpu_custom_call.1} parent=5 // pred_check_branch
        %891 = sbr.rel (%p889) target = $region116
      $region115: #{tpu_custom_call.1} parent=5 // pred_region
        // Predicated region
        $region117: #{tpu_custom_call.1} parent=115 // pred_check
          %p892 = pneg %p77
        $region118: #{tpu_custom_call.1} parent=115 // pred_check_branch
          %894 = sbr.rel (%p892) target = $region120
        $region119: #{tpu_custom_call.1} parent=115 // pred_region
          %s895 = sand.u32 %s67, 1
          %s896 = scalar_lea.sflag [#allocation3], %s895
          %s897 = sand.u32 %s67, 1
          %s898 = smul.addr %s897, 8
          %s899 = scalar_lea.vmem [#allocation2], %s898
          %901 = vsyncadd %s896, 0
          %s902 = sadd.s32 %s50, %s51
          %s903 = smul.addr %s902, 8
          %s904 = scalar_lea.hbm %s0, %s903
          %s906 = sshll.u32 %s904, 4
          %s907 = int_to_ptr.hbm [resolvable:$true] %s906
          %s908 = sshll.u32 %s899, 4
          %s909 = int_to_ptr.vmem [resolvable:$true] %s908
          %911 = dma.hbm_to_vmem [thread:$0]  %s907, 128, %s909, %s896
        $region120: #{tpu_custom_call.1} parent=115 // pred_fallthru
          _
      $region116: #{tpu_custom_call.1} parent=5 // pred_fallthru
        _
      %p912 = scmp.le.s32.totalorder 1, %s43
      %p913 = scmp.lt.s32.totalorder %s43, 17
      %p914 = pnand %p912, %p913
      %p915 = pneg %p914
      // Predicated region
      $region121: #{tpu_custom_call.1} parent=5 // pred_check
        _
      $region122: #{tpu_custom_call.1} parent=5 // pred_check_branch
        %917 = sbr.rel (%p914) target = $region124
      $region123: #{tpu_custom_call.1} parent=5 // pred_region
        %s918 = ssub.s32 %s43, 1
        %s919 = sand.u32 %s70, 1
        %s920 = scalar_lea.sflag [#allocation3], %s919
        %s921 = sand.u32 %s70, 1
        %s922 = smul.addr %s921, 8
        %s923 = scalar_lea.vmem [#allocation2], %s922
        // Predicated region
        $region125: #{tpu_custom_call.1} parent=123 // pred_check
          %p924 = pneg %p83
        $region126: #{tpu_custom_call.1} parent=123 // pred_check_branch
          %926 = sbr.rel (%p924) target = $region128
        $region127: #{tpu_custom_call.1} parent=123 // pred_region
          %928 = dma.done %s920, 128
        $region128: #{tpu_custom_call.1} parent=123 // pred_fallthru
          _
        // Predicated region
        $region129: #{tpu_custom_call.1} parent=123 // pred_check
          %p929 = pneg %p130
        $region130: #{tpu_custom_call.1} parent=123 // pred_check_branch
          %931 = sbr.rel (%p929) target = $region132
        $region131: #{tpu_custom_call.1} parent=123 // pred_region
          %933 = dma.done [#allocation5], 192
        $region132: #{tpu_custom_call.1} parent=123 // pred_fallthru
          _
        // Predicated region
        $region133: #{tpu_custom_call.1} parent=123 // pred_check
          %p934 = pneg %p214
        $region134: #{tpu_custom_call.1} parent=123 // pred_check_branch
          %936 = sbr.rel (%p934) target = $region136
        $region135: #{tpu_custom_call.1} parent=123 // pred_region
          %938 = dma.done [#allocation5], 256
        $region136: #{tpu_custom_call.1} parent=123 // pred_fallthru
          _
        // Predicated region
        $region137: #{tpu_custom_call.1} parent=123 // pred_check
          %p939 = pneg %p235
        $region138: #{tpu_custom_call.1} parent=123 // pred_check_branch
          %941 = sbr.rel (%p939) target = $region140
        $region139: #{tpu_custom_call.1} parent=123 // pred_region
          %943 = dma.done [#allocation8], 16
        $region140: #{tpu_custom_call.1} parent=123 // pred_fallthru
          _
        // Predicated region
        $region141: #{tpu_custom_call.1} parent=123 // pred_check
          %p944 = pneg %p256
        $region142: #{tpu_custom_call.1} parent=123 // pred_check_branch
          %946 = sbr.rel (%p944) target = $region144
        $region143: #{tpu_custom_call.1} parent=123 // pred_region
          %948 = dma.done [#allocation8], 256
        $region144: #{tpu_custom_call.1} parent=123 // pred_fallthru
          _
        // Predicated region
        $region145: #{tpu_custom_call.1} parent=123 // pred_check
          %p949 = pneg %p277
        $region146: #{tpu_custom_call.1} parent=123 // pred_check_branch
          %951 = sbr.rel (%p949) target = $region148
        $region147: #{tpu_custom_call.1} parent=123 // pred_region
          %953 = dma.done [#allocation11], 16
        $region148: #{tpu_custom_call.1} parent=123 // pred_fallthru
          _
        // Predicated region
        $region149: #{tpu_custom_call.1} parent=123 // pred_check
          %p954 = pneg %p298
        $region150: #{tpu_custom_call.1} parent=123 // pred_check_branch
          %956 = sbr.rel (%p954) target = $region152
        $region151: #{tpu_custom_call.1} parent=123 // pred_region
          %958 = dma.done [#allocation11], 256
        $region152: #{tpu_custom_call.1} parent=123 // pred_fallthru
          _
        // Predicated region
        $region153: #{tpu_custom_call.1} parent=123 // pred_check
          %p959 = pneg %p319
        $region154: #{tpu_custom_call.1} parent=123 // pred_check_branch
          %961 = sbr.rel (%p959) target = $region156
        $region155: #{tpu_custom_call.1} parent=123 // pred_region
          %963 = dma.done [#allocation14], 192
        $region156: #{tpu_custom_call.1} parent=123 // pred_fallthru
          _
        // Predicated region
        $region157: #{tpu_custom_call.1} parent=123 // pred_check
          %p964 = pneg %p340
        $region158: #{tpu_custom_call.1} parent=123 // pred_check_branch
          %966 = sbr.rel (%p964) target = $region160
        $region159: #{tpu_custom_call.1} parent=123 // pred_region
          %968 = dma.done [#allocation14], 16
        $region160: #{tpu_custom_call.1} parent=123 // pred_fallthru
          _
        // Predicated region
        $region161: #{tpu_custom_call.1} parent=123 // pred_check
          %p969 = pneg %p361
        $region162: #{tpu_custom_call.1} parent=123 // pred_check_branch
          %971 = sbr.rel (%p969) target = $region164
        $region163: #{tpu_custom_call.1} parent=123 // pred_region
          %973 = dma.done [#allocation17], 256
        $region164: #{tpu_custom_call.1} parent=123 // pred_fallthru
          _
        // Predicated region
        $region165: #{tpu_custom_call.1} parent=123 // pred_check
          %p974 = pneg %p382
        $region166: #{tpu_custom_call.1} parent=123 // pred_check_branch
          %976 = sbr.rel (%p974) target = $region168
        $region167: #{tpu_custom_call.1} parent=123 // pred_region
          %978 = dma.done [#allocation17], 16
        $region168: #{tpu_custom_call.1} parent=123 // pred_fallthru
          _
        // Predicated region
        $region169: #{tpu_custom_call.1} parent=123 // pred_check
          %p979 = pneg %p403
        $region170: #{tpu_custom_call.1} parent=123 // pred_check_branch
          %981 = sbr.rel (%p979) target = $region172
        $region171: #{tpu_custom_call.1} parent=123 // pred_region
          %983 = dma.done [#allocation20], 256
        $region172: #{tpu_custom_call.1} parent=123 // pred_fallthru
          _
        // Predicated region
        $region173: #{tpu_custom_call.1} parent=123 // pred_check
          %p984 = pneg %p424
        $region174: #{tpu_custom_call.1} parent=123 // pred_check_branch
          %986 = sbr.rel (%p984) target = $region176
        $region175: #{tpu_custom_call.1} parent=123 // pred_region
          %988 = dma.done [#allocation20], 16
        $region176: #{tpu_custom_call.1} parent=123 // pred_fallthru
          _
        // Predicated region
        $region177: #{tpu_custom_call.1} parent=123 // pred_check
          %p989 = pneg %p445
        $region178: #{tpu_custom_call.1} parent=123 // pred_check_branch
          %991 = sbr.rel (%p989) target = $region180
        $region179: #{tpu_custom_call.1} parent=123 // pred_region
          %993 = dma.done [#allocation23], 256
        $region180: #{tpu_custom_call.1} parent=123 // pred_fallthru
          _
        // Predicated region
        $region181: #{tpu_custom_call.1} parent=123 // pred_check
          %p994 = pneg %p466
        $region182: #{tpu_custom_call.1} parent=123 // pred_check_branch
          %996 = sbr.rel (%p994) target = $region184
        $region183: #{tpu_custom_call.1} parent=123 // pred_region
          %998 = dma.done [#allocation23], 16
        $region184: #{tpu_custom_call.1} parent=123 // pred_fallthru
          _
        // Predicated region
        $region185: #{tpu_custom_call.1} parent=123 // pred_check
          %p999 = pneg %p550
        $region186: #{tpu_custom_call.1} parent=123 // pred_check_branch
          %1001 = sbr.rel (%p999) target = $region188
        $region187: #{tpu_custom_call.1} parent=123 // pred_region
          %1003 = dma.done [#allocation26], 128
        $region188: #{tpu_custom_call.1} parent=123 // pred_fallthru
          _
        %s1004 = sand.u32 %s70, 1
        %s1005 = scalar_lea.sflag [#allocation3], %s1004
        %s1006 = sand.u32 %s70, 1
        %s1007 = smul.addr %s1006, 8
        %s1008 = scalar_lea.vmem [#allocation2], %s1007
        %p1009 = pneg %p83
        %p1010 = pneg %p80
        %p1011 = scmp.lt.s32.totalorder %s52, 0
        %s1012 = scalar_select %p1011, %s52, 0
        %s1013 = smul.addr %s1012, 8
        %s1014 = scalar_lea.vmem %s1, %s1013
        %p1015 = pneg %p109
        %p1016 = pneg %p106
        %p1017 = pneg %p130
        %p1018 = pneg %p127
        %p1019 = pneg %p151
        %p1020 = pneg %p148
        %p1021 = pneg %p172
        %p1022 = pneg %p169
        %p1023 = pneg %p193
        %p1024 = pneg %p190
        %p1025 = pneg %p214
        %p1026 = pneg %p211
        %p1027 = pneg %p235
        %p1028 = pneg %p232
        %p1029 = pneg %p256
        %p1030 = pneg %p253
        %p1031 = pneg %p277
        %p1032 = pneg %p274
        %p1033 = pneg %p298
        %p1034 = pneg %p295
        %p1035 = pneg %p319
        %p1036 = pneg %p316
        %p1037 = pneg %p340
        %p1038 = pneg %p337
        %p1039 = pneg %p361
        %p1040 = pneg %p358
        %p1041 = pneg %p382
        %p1042 = pneg %p379
        %p1043 = pneg %p403
        %p1044 = pneg %p400
        %p1045 = pneg %p424
        %p1046 = pneg %p421
        %p1047 = pneg %p445
        %p1048 = pneg %p442
        %p1049 = pneg %p466
        %p1050 = pneg %p463
        %p1051 = pneg %p487
        %p1052 = pneg %p484
        %p1053 = pneg %p508
        %p1054 = pneg %p505
        %p1055 = pneg %p529
        %p1056 = pneg %p526
        %p1057 = pneg %p550
        %p1058 = pneg %p547
        %p1059 = pneg %p571
        %p1060 = pneg %p568
        %p1061 = pneg %p592
        %p1062 = pneg %p589
        %p1063 = pneg %p613
        %p1064 = pneg %p610
        %p1065 = pneg %p641
        %p1066 = pneg %p638
        %p1067 = scmp.lt.s32.totalorder %s53, 15
        %s1068 = scalar_select %p1067, %s53, 15
        %p1069 = scmp.lt.s32.totalorder %s52, 0
        %s1070 = scalar_select %p1069, %s52, 0
        %s1071 = sadd.s32 %s1070, %s1068
        %s1072 = smul.addr %s1071, 8
        %s1073 = scalar_lea.vmem %s26, %s1072
        %p1074 = scmp.lt.s32.totalorder %s52, 0
        %s1075 = scalar_select %p1074, %s52, 0
        %s1076 = smul.addr %s1075, 8
        %s1077 = scalar_lea.vmem %s1, %s1076
        %p1078 = scmp.lt.s32.totalorder %s53, 15
        %s1079 = scalar_select %p1078, %s53, 15
        %p1080 = scmp.lt.s32.totalorder %s52, 0
        %s1081 = scalar_select %p1080, %s52, 0
        %s1082 = sadd.s32 %s1081, %s1079
        %s1083 = smul.addr %s1082, 8
        %s1084 = scalar_lea.vmem %s26, %s1083
        %v1086 = vld [vmem:[%s923] sm:$0xff]
        %v1087 = vld [vmem:[%s1077] sm:$0xff]
        %v1088 = vpack.c.bf16 %v1086, %v1086
        %v1089 = vld [vmem:[#allocation4] sm:$0xf]
        %v1090 = vld [vmem:[#allocation4 + $0x4] sm:$0xf]
        %v1091 = vld [vmem:[#allocation4 + $0x8] sm:$0xf]
        %v1092 = vld [vmem:[%s3] sm:$0x1]
        %v1094 = vperm.slane %v1092, 0
        %v1099 = vunpack.c.l.b16 %v1089
        %v1100 = vunpack.c.l.b16 %v1090
        %v1101 = vunpack.c.l.b16 %v1091
        %v1102 = vpack.c.b16 %v1100, %v1099
        %v1103 = vpack.c.b16 %v1101, %v1101
        %vm1105 = vcmask 195584
        %v1107 = vsel %vm1105, %v1088, 0
        %vm1109 = vcmask 1043456
        %v1111 = vsel %vm1109, %v1103, 0
        %1113 = vmatpush.bf16.msra.mxu0 0
        %1114 = vmatpush.bf16.msra.mxu0 0
        %1115 = vmatpush.bf16.msra.mxu0 0
        %1116 = vmatpush.bf16.msra.mxu0 0
        %1117 = vmatpush.bf16.msra.mxu0 0
        %1118 = vmatpush.bf16.msra.mxu0 0
        %1119 = vmatpush.bf16.msra.mxu0 %v1111
        %1120 = vmatpush.bf16.msra.mxu0 %v1102
        %1121 = vmatmul.bf16.gmra.mxu0 %v1107
        %v1122 = vpop.f32.mrf.mxu0
        %v1123 = vadd.f32 %v1094, %v1122
        %v1124 = vpop.f32.mrf.mxu0
        %1125 = vdwg.mxu0
        %v1126 = vmax.f32 %v1123, 0.0
        %v1127 = vpack.c.bf16 %v1126, %v1126
        %v1128 = vld [vmem:[%s4] sm:$0xf]
        %v1129 = vld [vmem:[%s4 + $0x4] sm:$0xf]
        %v1130 = vld [vmem:[%s4 + $0x8] sm:$0xf]
        %v1131 = vld [vmem:[%s4 + $0xc] sm:$0xf]
        %v1132 = vld [vmem:[%s5] sm:$0x1]
        %v1134 = vperm.slane %v1132, 0
        %v1140 = vunpack.c.l.b16 %v1128
        %v1141 = vunpack.c.l.b16 %v1129
        %v1142 = vunpack.c.l.b16 %v1130
        %v1143 = vunpack.c.l.b16 %v1131
        %v1144 = vpack.c.b16 %v1141, %v1140
        %v1145 = vpack.c.b16 %v1143, %v1142
        %vm1148 = vcmask 261120
        %v1150 = vsel %vm1148, %v1127, 0
        %1152 = vmatpush.bf16.msra.mxu0 0
        %1153 = vmatpush.bf16.msra.mxu0 0
        %1154 = vmatpush.bf16.msra.mxu0 0
        %1155 = vmatpush.bf16.msra.mxu0 0
        %1156 = vmatpush.bf16.msra.mxu0 0
        %1157 = vmatpush.bf16.msra.mxu0 0
        %1158 = vmatpush.bf16.msra.mxu0 %v1145
        %1159 = vmatpush.bf16.msra.mxu0 %v1144
        %1160 = vmatmul.bf16.gmra.mxu0 %v1150
        %v1161 = vpop.f32.mrf.mxu0
        %v1162 = vadd.f32 %v1134, %v1161
        %v1163 = vpop.f32.mrf.mxu0
        %1164 = vdwg.mxu0
        %v1165 = vmax.f32 %v1162, 0.0
        %v1166 = vpack.c.bf16 %v1165, %v1165
        %v1167 = vld [vmem:[#allocation6] sm:$0xf]
        %v1168 = vld [vmem:[#allocation6 + $0x4] sm:$0xf]
        %v1169 = vld [vmem:[#allocation6 + $0x8] sm:$0xf]
        %v1170 = vld [vmem:[#allocation6 + $0xc] sm:$0xf]
        %v1171 = vld [vmem:[#allocation7] sm:$0x1]
        %v1173 = vperm.slane %v1171, 0
        %v1179 = vunpack.c.l.b16 %v1167
        %v1180 = vunpack.c.l.b16 %v1168
        %v1181 = vunpack.c.l.b16 %v1169
        %v1182 = vunpack.c.l.b16 %v1170
        %v1183 = vpack.c.b16 %v1180, %v1179
        %v1184 = vpack.c.b16 %v1182, %v1181
        %v1188 = vsel %vm1148, %v1166, 0
        %1190 = vmatpush.bf16.msra.mxu0 0
        %1191 = vmatpush.bf16.msra.mxu0 0
        %1192 = vmatpush.bf16.msra.mxu0 0
        %1193 = vmatpush.bf16.msra.mxu0 0
        %1194 = vmatpush.bf16.msra.mxu0 0
        %1195 = vmatpush.bf16.msra.mxu0 0
        %1196 = vmatpush.bf16.msra.mxu0 %v1184
        %1197 = vmatpush.bf16.msra.mxu0 %v1183
        %1198 = vmatmul.bf16.gmra.mxu0 %v1188
        %v1199 = vpop.f32.mrf.mxu0
        %v1200 = vadd.f32 %v1173, %v1199
        %v1201 = vpop.f32.mrf.mxu0
        %1202 = vdwg.mxu0
        %v1203 = vmax.f32 %v1200, 0.0
        %v1204 = vpack.c.bf16 %v1203, %v1203
        %v1205 = vld [vmem:[#allocation9] sm:$0xf]
        %v1206 = vld [vmem:[#allocation9 + $0x4] sm:$0xf]
        %v1207 = vld [vmem:[#allocation9 + $0x8] sm:$0xf]
        %v1208 = vld [vmem:[#allocation9 + $0xc] sm:$0xf]
        %v1209 = vld [vmem:[#allocation10] sm:$0x1]
        %v1211 = vperm.slane %v1209, 0
        %v1217 = vunpack.c.l.b16 %v1205
        %v1218 = vunpack.c.l.b16 %v1206
        %v1219 = vunpack.c.l.b16 %v1207
        %v1220 = vunpack.c.l.b16 %v1208
        %v1221 = vpack.c.b16 %v1218, %v1217
        %v1222 = vpack.c.b16 %v1220, %v1219
        %v1226 = vsel %vm1148, %v1204, 0
        %1228 = vmatpush.bf16.msra.mxu0 0
        %1229 = vmatpush.bf16.msra.mxu0 0
        %1230 = vmatpush.bf16.msra.mxu0 0
        %1231 = vmatpush.bf16.msra.mxu0 0
        %1232 = vmatpush.bf16.msra.mxu0 0
        %1233 = vmatpush.bf16.msra.mxu0 0
        %1234 = vmatpush.bf16.msra.mxu0 %v1222
        %1235 = vmatpush.bf16.msra.mxu0 %v1221
        %1236 = vmatmul.bf16.gmra.mxu0 %v1226
        %v1237 = vpop.f32.mrf.mxu0
        %v1238 = vadd.f32 %v1211, %v1237
        %v1239 = vpop.f32.mrf.mxu0
        %1240 = vdwg.mxu0
        %v1241 = vmax.f32 %v1238, 0.0
        %v1242 = vpack.c.bf16 %v1241, %v1241
        %v1243 = vld [vmem:[#allocation12] sm:$0xf]
        %v1244 = vld [vmem:[#allocation12 + $0x4] sm:$0xf]
        %v1245 = vld [vmem:[#allocation12 + $0x8] sm:$0xf]
        %v1246 = vld [vmem:[#allocation12 + $0xc] sm:$0xf]
        %v1247 = vld [vmem:[#allocation13] sm:$0xf]
        %v1248 = vld [vmem:[#allocation13 + $0x4] sm:$0xf]
        %v1249 = vld [vmem:[#allocation13 + $0x8] sm:$0xf]
        %v1253 = vunpack.c.l.b16 %v1247
        %v1254 = vunpack.c.l.b16 %v1248
        %v1255 = vunpack.c.l.b16 %v1249
        %v1256 = vpack.c.b16 %v1254, %v1253
        %v1257 = vpack.c.b16 %v1255, %v1255
        %v1260 = vsel %vm1109, %v1257, 0
        %1262 = vmatpush.bf16.msra.mxu0 0
        %1263 = vmatpush.bf16.msra.mxu0 0
        %1264 = vmatpush.bf16.msra.mxu0 0
        %1265 = vmatpush.bf16.msra.mxu0 0
        %1266 = vmatpush.bf16.msra.mxu0 0
        %1267 = vmatpush.bf16.msra.mxu0 0
        %1268 = vmatpush.bf16.msra.mxu0 %v1260
        %1269 = vmatpush.bf16.msra.mxu0 %v1256
        %1270 = vmatmul.bf16.gmra.mxu0 %v1107
        %v1271 = vpop.f32.mrf.mxu0
        %v1272 = vadd.f32 0.0, %v1271
        %v1273 = vpop.f32.mrf.mxu0
        %1274 = vdwg.mxu0
        %v1279 = vunpack.c.l.b16 %v1243
        %v1280 = vunpack.c.l.b16 %v1244
        %v1281 = vunpack.c.l.b16 %v1245
        %v1282 = vunpack.c.l.b16 %v1246
        %v1283 = vpack.c.b16 %v1280, %v1279
        %v1284 = vpack.c.b16 %v1282, %v1281
        %v1288 = vsel %vm1148, %v1242, 0
        %1290 = vmatpush.bf16.msra.mxu0 0
        %1291 = vmatpush.bf16.msra.mxu0 0
        %1292 = vmatpush.bf16.msra.mxu0 0
        %1293 = vmatpush.bf16.msra.mxu0 0
        %1294 = vmatpush.bf16.msra.mxu0 0
        %1295 = vmatpush.bf16.msra.mxu0 0
        %1296 = vmatpush.bf16.msra.mxu0 %v1284
        %1297 = vmatpush.bf16.msra.mxu0 %v1283
        %1298 = vmatmul.bf16.gmra.mxu0 %v1288
        %v1299 = vpop.f32.mrf.mxu0
        %v1300 = vadd.f32 %v1272, %v1299
        %v1301 = vpop.f32.mrf.mxu0
        %1302 = vdwg.mxu0
        %v1303 = vld [vmem:[#allocation15] sm:$0x1]
        %v1305 = vperm.slane %v1303, 0
        %v1307 = vadd.f32 %v1300, %v1305
        %v1308 = vmax.f32 %v1307, 0.0
        %v1309 = vpack.c.bf16 %v1308, %v1308
        %v1310 = vld [vmem:[#allocation16] sm:$0xf]
        %v1311 = vld [vmem:[#allocation16 + $0x4] sm:$0xf]
        %v1312 = vld [vmem:[#allocation16 + $0x8] sm:$0xf]
        %v1313 = vld [vmem:[#allocation16 + $0xc] sm:$0xf]
        %v1314 = vld [vmem:[#allocation18] sm:$0x1]
        %v1316 = vperm.slane %v1314, 0
        %v1322 = vunpack.c.l.b16 %v1310
        %v1323 = vunpack.c.l.b16 %v1311
        %v1324 = vunpack.c.l.b16 %v1312
        %v1325 = vunpack.c.l.b16 %v1313
        %v1326 = vpack.c.b16 %v1323, %v1322
        %v1327 = vpack.c.b16 %v1325, %v1324
        %v1331 = vsel %vm1148, %v1309, 0
        %1333 = vmatpush.bf16.msra.mxu0 0
        %1334 = vmatpush.bf16.msra.mxu0 0
        %1335 = vmatpush.bf16.msra.mxu0 0
        %1336 = vmatpush.bf16.msra.mxu0 0
        %1337 = vmatpush.bf16.msra.mxu0 0
        %1338 = vmatpush.bf16.msra.mxu0 0
        %1339 = vmatpush.bf16.msra.mxu0 %v1327
        %1340 = vmatpush.bf16.msra.mxu0 %v1326
        %1341 = vmatmul.bf16.gmra.mxu0 %v1331
        %v1342 = vpop.f32.mrf.mxu0
        %v1343 = vadd.f32 %v1316, %v1342
        %v1344 = vpop.f32.mrf.mxu0
        %1345 = vdwg.mxu0
        %v1346 = vmax.f32 %v1343, 0.0
        %v1347 = vpack.c.bf16 %v1346, %v1346
        %v1348 = vld [vmem:[#allocation19] sm:$0xf]
        %v1349 = vld [vmem:[#allocation19 + $0x4] sm:$0xf]
        %v1350 = vld [vmem:[#allocation19 + $0x8] sm:$0xf]
        %v1351 = vld [vmem:[#allocation19 + $0xc] sm:$0xf]
        %v1352 = vld [vmem:[#allocation21] sm:$0x1]
        %v1354 = vperm.slane %v1352, 0
        %v1360 = vunpack.c.l.b16 %v1348
        %v1361 = vunpack.c.l.b16 %v1349
        %v1362 = vunpack.c.l.b16 %v1350
        %v1363 = vunpack.c.l.b16 %v1351
        %v1364 = vpack.c.b16 %v1361, %v1360
        %v1365 = vpack.c.b16 %v1363, %v1362
        %v1369 = vsel %vm1148, %v1347, 0
        %1371 = vmatpush.bf16.msra.mxu0 0
        %1372 = vmatpush.bf16.msra.mxu0 0
        %1373 = vmatpush.bf16.msra.mxu0 0
        %1374 = vmatpush.bf16.msra.mxu0 0
        %1375 = vmatpush.bf16.msra.mxu0 0
        %1376 = vmatpush.bf16.msra.mxu0 0
        %1377 = vmatpush.bf16.msra.mxu0 %v1365
        %1378 = vmatpush.bf16.msra.mxu0 %v1364
        %1379 = vmatmul.bf16.gmra.mxu0 %v1369
        %v1380 = vpop.f32.mrf.mxu0
        %v1381 = vadd.f32 %v1354, %v1380
        %v1382 = vpop.f32.mrf.mxu0
        %1383 = vdwg.mxu0
        %v1384 = vmax.f32 %v1381, 0.0
        %v1385 = vpack.c.bf16 %v1384, %v1384
        %v1386 = vld [vmem:[#allocation22] sm:$0xf]
        %v1387 = vld [vmem:[#allocation22 + $0x4] sm:$0xf]
        %v1388 = vld [vmem:[#allocation22 + $0x8] sm:$0xf]
        %v1389 = vld [vmem:[#allocation22 + $0xc] sm:$0xf]
        %v1390 = vld [vmem:[#allocation24] sm:$0x1]
        %v1392 = vperm.slane %v1390, 0
        %v1398 = vunpack.c.l.b16 %v1386
        %v1399 = vunpack.c.l.b16 %v1387
        %v1400 = vunpack.c.l.b16 %v1388
        %v1401 = vunpack.c.l.b16 %v1389
        %v1402 = vpack.c.b16 %v1399, %v1398
        %v1403 = vpack.c.b16 %v1401, %v1400
        %v1407 = vsel %vm1148, %v1385, 0
        %1409 = vmatpush.bf16.msra.mxu0 0
        %1410 = vmatpush.bf16.msra.mxu0 0
        %1411 = vmatpush.bf16.msra.mxu0 0
        %1412 = vmatpush.bf16.msra.mxu0 0
        %1413 = vmatpush.bf16.msra.mxu0 0
        %1414 = vmatpush.bf16.msra.mxu0 0
        %1415 = vmatpush.bf16.msra.mxu0 %v1403
        %1416 = vmatpush.bf16.msra.mxu0 %v1402
        %1417 = vmatmul.bf16.gmra.mxu0 %v1407
        %v1418 = vpop.f32.mrf.mxu0
        %v1419 = vadd.f32 %v1392, %v1418
        %v1420 = vpop.f32.mrf.mxu0
        %1421 = vdwg.mxu0
        %v1422 = vmax.f32 %v1419, 0.0
        %v1423 = vpack.c.bf16 %v1422, %v1422
        %v1424 = vld [vmem:[%s19] sm:$0xf]
        %v1425 = vld [vmem:[%s19 + $0x4] sm:$0xf]
        %v1426 = vld [vmem:[%s19 + $0x8] sm:$0xf]
        %v1427 = vld [vmem:[%s19 + $0xc] sm:$0xf]
        %v1428 = vld [vmem:[%s20] sm:$0x1]
        %v1430 = vperm.slane %v1428, 0
        %v1436 = vunpack.c.l.b16 %v1424
        %v1437 = vunpack.c.l.b16 %v1425
        %v1438 = vunpack.c.l.b16 %v1426
        %v1439 = vunpack.c.l.b16 %v1427
        %v1440 = vpack.c.b16 %v1437, %v1436
        %v1441 = vpack.c.b16 %v1439, %v1438
        %v1445 = vsel %vm1148, %v1423, 0
        %1447 = vmatpush.bf16.msra.mxu0 0
        %1448 = vmatpush.bf16.msra.mxu0 0
        %1449 = vmatpush.bf16.msra.mxu0 0
        %1450 = vmatpush.bf16.msra.mxu0 0
        %1451 = vmatpush.bf16.msra.mxu0 0
        %1452 = vmatpush.bf16.msra.mxu0 0
        %1453 = vmatpush.bf16.msra.mxu0 %v1441
        %1454 = vmatpush.bf16.msra.mxu0 %v1440
        %1455 = vmatmul.bf16.gmra.mxu0 %v1445
        %v1456 = vpop.f32.mrf.mxu0
        %v1457 = vadd.f32 %v1430, %v1456
        %v1458 = vpop.f32.mrf.mxu0
        %1459 = vdwg.mxu0
        %v1460 = vpack.c.bf16 %v1457, %v1457
        %v1461 = vld [vmem:[%s21] sm:$0xf]
        %v1462 = vld [vmem:[%s21 + $0x4] sm:$0xf]
        %v1463 = vld [vmem:[%s21 + $0x8] sm:$0xf]
        %v1464 = vld [vmem:[%s21 + $0xc] sm:$0xf]
        %v1465 = vpack.c.bf16 %v1087, %v1087
        %v1466 = vld [vmem:[#allocation25] sm:$0xf]
        %v1467 = vld [vmem:[#allocation25 + $0x4] sm:$0xf]
        %v1470 = vunpack.c.l.b16 %v1466
        %v1471 = vunpack.c.l.b16 %v1467
        %v1472 = vpack.c.b16 %v1471, %v1470
        %vm1473 = vcmask 121856
        %v1475 = vsel %vm1473, %v1465, 0
        %vm1477 = vcmask 1046528
        %vm1478 = vcmask 1047552
        %v1479 = vsel %vm1477, 4294967295, 65535
        %v1480 = vsel %vm1478, %v1479, 0
        %v1482 = vand.u32 %v1472, %v1480
        %1484 = vmatpush.bf16.msra.mxu0 0
        %1485 = vmatpush.bf16.msra.mxu0 0
        %1486 = vmatpush.bf16.msra.mxu0 0
        %1487 = vmatpush.bf16.msra.mxu0 0
        %1488 = vmatpush.bf16.msra.mxu0 0
        %1489 = vmatpush.bf16.msra.mxu0 0
        %1490 = vmatpush.bf16.msra.mxu0 0
        %1491 = vmatpush.bf16.msra.mxu0 %v1482
        %1492 = vmatmul.bf16.gmra.mxu0 %v1475
        %v1493 = vpop.f32.mrf.mxu0
        %v1494 = vadd.f32 0.0, %v1493
        %v1495 = vpop.f32.mrf.mxu0
        %1496 = vdwg.mxu0
        %v1501 = vunpack.c.l.b16 %v1461
        %v1502 = vunpack.c.l.b16 %v1462
        %v1503 = vunpack.c.l.b16 %v1463
        %v1504 = vunpack.c.l.b16 %v1464
        %v1505 = vpack.c.b16 %v1502, %v1501
        %v1506 = vpack.c.b16 %v1504, %v1503
        %v1510 = vsel %vm1148, %v1460, 0
        %1512 = vmatpush.bf16.msra.mxu0 0
        %1513 = vmatpush.bf16.msra.mxu0 0
        %1514 = vmatpush.bf16.msra.mxu0 0
        %1515 = vmatpush.bf16.msra.mxu0 0
        %1516 = vmatpush.bf16.msra.mxu0 0
        %1517 = vmatpush.bf16.msra.mxu0 0
        %1518 = vmatpush.bf16.msra.mxu0 %v1506
        %1519 = vmatpush.bf16.msra.mxu0 %v1505
        %1520 = vmatmul.bf16.gmra.mxu0 %v1510
        %v1521 = vpop.f32.mrf.mxu0
        %v1522 = vadd.f32 %v1494, %v1521
        %v1523 = vpop.f32.mrf.mxu0
        %1524 = vdwg.mxu0
        %v1525 = vld [vmem:[%s23] sm:$0x1]
        %v1527 = vperm.slane %v1525, 0
        %v1529 = vadd.f32 %v1522, %v1527
        %v1530 = vmax.f32 %v1529, 0.0
        %v1531 = vpack.c.bf16 %v1530, %v1530
        %v1532 = vld [vmem:[%s24] sm:$0xf]
        %v1533 = vld [vmem:[%s24 + $0x4] sm:$0xf]
        %v1534 = vld [vmem:[%s25] sm:$0x1]
        %v1536 = vperm.slane %v1534, 0
        %v1540 = vunpack.c.l.b16 %v1532
        %v1541 = vunpack.c.l.b16 %v1533
        %v1542 = vpack.c.b16 %v1541, %v1540
        %vm1544 = vcmask 130048
        %v1546 = vsel %vm1544, %v1531, 0
        %1548 = vmatpush.bf16.msra.mxu0 0
        %1549 = vmatpush.bf16.msra.mxu0 0
        %1550 = vmatpush.bf16.msra.mxu0 0
        %1551 = vmatpush.bf16.msra.mxu0 0
        %1552 = vmatpush.bf16.msra.mxu0 0
        %1553 = vmatpush.bf16.msra.mxu0 0
        %1554 = vmatpush.bf16.msra.mxu0 0
        %1555 = vmatpush.bf16.msra.mxu0 %v1542
        %1556 = vmatmul.bf16.gmra.mxu0 %v1546
        %v1557 = vpop.f32.mrf.mxu0
        %v1558 = vadd.f32 %v1536, %v1557
        %v1559 = vpop.f32.mrf.mxu0
        %1560 = vdwg.mxu0
        %1562 = vrot.lane.b32.xlu0 %v1457, 96
        %v1563 = vpop.permute.xlu0 %1562
        %1566 = vrot.lane.b32.xlu0 %v1558, 1
        %v1567 = vpop.permute.xlu0 %1566
        %vm1569 = vcmask 7168
        %v1570 = vsel %vm1569, %v1563, %v1567
        %vm1571 = vcmask 31744
        %1572 = vst.msk [vmem:[%s1084] sm:$0xff] %vm1571, %v1570
        %p1573 = scmp.lt.s32.totalorder %s53, 15
        %s1574 = scalar_select %p1573, %s53, 15
        %p1575 = scmp.lt.s32.totalorder %s52, 0
        %s1576 = scalar_select %p1575, %s52, 0
        %s1577 = sadd.s32 %s1576, %s1574
        %s1578 = smul.addr %s1577, 8
        %s1579 = scalar_lea.vmem %s26, %s1578
        // Predicated region
        $region189: #{tpu_custom_call.1} parent=123 // pred_check
          %p1580 = pneg %p638
        $region190: #{tpu_custom_call.1} parent=123 // pred_check_branch
          %1582 = sbr.rel (%p1580) target = $region192
        $region191: #{tpu_custom_call.1} parent=123 // pred_region
          _
        $region192: #{tpu_custom_call.1} parent=123 // pred_fallthru
          _
      $region124: #{tpu_custom_call.1} parent=5 // pred_fallthru
        _
      %p1583 = scmp.le.s32.totalorder 2, %s43
      // Predicated region
      $region193: #{tpu_custom_call.1} parent=5 // pred_check
        %p1584 = pneg %p1583
      $region194: #{tpu_custom_call.1} parent=5 // pred_check_branch
        %1586 = sbr.rel (%p1584) target = $region196
      $region195: #{tpu_custom_call.1} parent=5 // pred_region
        %s1587 = ssub.s32 %s43, 2
        // Predicated region
        $region197: #{tpu_custom_call.1} parent=195 // pred_check
          %p1588 = pneg %p644
        $region198: #{tpu_custom_call.1} parent=195 // pred_check_branch
          %1590 = sbr.rel (%p1588) target = $region200
        $region199: #{tpu_custom_call.1} parent=195 // pred_region
          %p1591 = scmp.lt.s32.totalorder %s55, 15
          %s1592 = scalar_select %p1591, %s55, 15
          %p1593 = scmp.lt.s32.totalorder %s54, 0
          %s1594 = scalar_select %p1593, %s54, 0
          %s1595 = sadd.s32 %s1594, %s1592
          %s1596 = smul.addr %s1595, 8
          %s1597 = scalar_lea.vmem %s26, %s1596
        $region200: #{tpu_custom_call.1} parent=195 // pred_fallthru
          _
      $region196: #{tpu_custom_call.1} parent=5 // pred_fallthru
        _
    $region6: #{tpu_custom_call.1} parent=1 // loop_footer
      %s47 = sadd.s32 1, %s43
    $region7: #{tpu_custom_call.1} parent=1 // loop_footer_branch
      %42 = sbr.rel target = $region3
    $region8: #{tpu_custom_call.1} parent=1 // loop_exit
      _
    %1598 = vsyncpa [#allocation3], 1
    %s1599 = scalar_lea.sflag [#allocation3], 1
    %1600 = vsyncpa %s1599, 1
    %1601 = vsyncpa [#allocation5], 1
    %1602 = vsyncpa [#allocation8], 1
    %1603 = vsyncpa [#allocation11], 1
    %1604 = vsyncpa [#allocation14], 1
    %1605 = vsyncpa [#allocation17], 1
    %1606 = vsyncpa [#allocation20], 1
    %1607 = vsyncpa [#allocation23], 1
    %1608 = vsyncpa [#allocation26], 1

</llo_original>
